<compile_context>
chip_gen: v6e
topology: v6e:2x2x1
jax: 0.10.0
libtpu: 0.0.40
codegen_flags: <defaults>
</compile_context>

<pallas_src>
import functools

import jax
import jax.numpy as jnp
from jax import lax
from jax.experimental import pallas as pl
from jax.experimental.pallas import tpu as pltpu

# Left pad (in W) of the stage-2 halo scratch: a multiple of 8 so the interior write and
# the centre tap sit at a sublane-aligned offset (unmasked vst / cheap vld).
_HALO_L = 8


def _tree_sum(xs):
    # Pairwise tree reduction: shorter VALU dependency chain than a serial chain.
    xs = list(xs)
    while len(xs) > 1:
        nxt = [xs[i] + xs[i + 1] for i in range(0, len(xs) - 1, 2)]
        if len(xs) % 2:
            nxt.append(xs[-1])
        xs = nxt
    return xs[0]


# -----------------------------------------------------------------------------
# Fused kernel: NB images per grid step.
#   xph_ref : (NB, 4*hh, wh, C1)  stride-2 phase layout of the padded NHWC input;
#                                 phase p = (r%2)*2 + (c%2) lives at rows [p*hh, (p+1)*hh)
#   wdw1    : (9, 1, C1)          depthwise-1 weights, tap k = di*3 + dj
#   s1,b1   : (1, C1)             folded BN1
#   wpw1    : (C1, C2)  bf16      pointwise-1 weights
#   s2,b2   : (1, C2)             folded BN2
#   wdw2    : (9, 1, C2)          depthwise-2 weights
#   s3,b3   : (1, C2)             folded BN3
#   wpw2    : (C2, C2)  bf16      pointwise-2 weights
#   s4,b4   : (1, C2)             folded BN4
#   o_ref   : (NB, H1, W1, C2)
#   y1p_ref : (NB, H1+2, _HALO_L+W1+8, C2)  VMEM scratch: stage-1 output with halo
# -----------------------------------------------------------------------------
def _fused_block_kernel(xph_ref, wdw1_ref, s1_ref, b1_ref, wpw1_ref, s2_ref,
                        b2_ref, wdw2_ref, s3_ref, b3_ref, wpw2_ref, s4_ref,
                        b4_ref, o_ref, y1p_ref):
    nb, h1, w1, c2 = o_ref.shape
    c1 = xph_ref.shape[-1]
    hh = xph_ref.shape[1] // 4          # = H1 + 1 (padded half-height per phase)
    m = nb * h1 * w1
    ws = y1p_ref.shape[2]               # = _HALO_L + W1 + right pad

    # ---- stage 1: depthwise 3x3 stride-2 (taps via phase decomposition) -------
    # Accumulate in (NB, H1, W1, C1); reshape to (M, C1) exactly ONCE per stage.
    wdw1 = wdw1_ref[...]                                   # (9, 1, C1)
    taps = []
    for di in range(3):
        for dj in range(3):
            p = (di % 2) * 2 + (dj % 2)
            oi, oj = di // 2, dj // 2
            t = xph_ref[:, p * hh + oi:p * hh + oi + h1, oj:oj + w1, :]
            taps.append(t * wdw1[di * 3 + dj])             # (NB, H1, W1, C1)
    acc1 = _tree_sum(taps)
    t1 = jnp.clip(acc1 * s1_ref[...] + b1_ref[...], 0.0, 6.0).reshape(m, c1)

    # ---- stage 1: pointwise 1x1 on MXU (bf16 in / f32 acc) + BN2 + ReLU6 ------
    u1 = jnp.dot(t1.astype(jnp.bfloat16), wpw1_ref[...],
                 preferred_element_type=jnp.float32)       # (M, C2)
    y1 = jnp.clip(u1 * s2_ref[...] + b2_ref[...], 0.0, 6.0)

    # ---- stage-1 output stays on-chip: halo scratch, zero ONLY the border -----
    zero_row = jnp.zeros((nb, 1, ws, c2), jnp.float32)
    y1p_ref[:, 0:1, :, :] = zero_row                                   # top row
    y1p_ref[:, h1 + 1:h1 + 2, :, :] = zero_row                         # bottom row
    y1p_ref[:, :, 0:_HALO_L, :] = jnp.zeros((nb, h1 + 2, _HALO_L, c2),
                                            jnp.float32)              # left (aligned)
    y1p_ref[:, :, _HALO_L + w1:, :] = jnp.zeros(
        (nb, h1 + 2, ws - _HALO_L - w1, c2), jnp.float32)              # right
    # Interior written exactly once, at sublane-aligned W offset _HALO_L.
    y1p_ref[:, 1:1 + h1, _HALO_L:_HALO_L + w1, :] = y1.reshape(nb, h1, w1, c2)

    # ---- stage 2: depthwise 3x3 stride-1 from the halo + BN3 + ReLU6 ----------
    wdw2 = wdw2_ref[...]                                   # (9, 1, C2)
    taps = []
    for di in range(3):
        for dj in range(3):
            t = y1p_ref[:, di:di + h1,
                        _HALO_L - 1 + dj:_HALO_L - 1 + dj + w1, :]
            taps.append(t * wdw2[di * 3 + dj])
    acc2 = _tree_sum(taps)
    t2 = jnp.clip(acc2 * s3_ref[...] + b3_ref[...], 0.0, 6.0).reshape(m, c2)

    # ---- stage 2: pointwise 1x1 + BN4 + ReLU6 ----------------------------------
    u2 = jnp.dot(t2.astype(jnp.bfloat16), wpw2_ref[...],
                 preferred_element_type=jnp.float32)
    y2 = jnp.clip(u2 * s4_ref[...] + b4_ref[...], 0.0, 6.0)

    o_ref[...] = y2.reshape(nb, h1, w1, c2).astype(o_ref.dtype)


def _whole_spec(shape):
    ndim = len(shape)
    return pl.BlockSpec(shape, lambda i, _n=ndim: (0,) * _n)


@functools.partial(jax.jit, static_argnames=("out_channels", "images_per_step"))
def depthwise_separable_forward(x_nchw, params, out_channels, images_per_step=None):
    n, c_in, h, w = x_nchw.shape
    if h % 2 or w % 2:
        raise ValueError("spatial dims must be even for the stride-2 stage")
    h1, w1 = h // 2, w // 2
    hh, wh = h1 + 1, w1 + 1
    c2 = out_channels

    # Images per grid step: grow the pointwise-matmul M = NB*H1*W1 toward >=256
    # (fills the 256-wide MXU on v6e/v7x, amortises per-step overhead).  NB | N.
    if images_per_step is None:
        nb = min(n, max(1, pl.cdiv(256, h1 * w1)))
        while n % nb:
            nb -= 1
    else:
        nb = images_per_step
    assert n % nb == 0, (n, nb)

    # ONE layout-change pass in HBM (unavoidable anyway for the NCHW boundary):
    # spatial pad + NCHW->NHWC transpose + stride-2 phase split fused on the
    # un-inflated-channel input.  No 128-lane padding is ever written to HBM.
    xp = jnp.pad(x_nchw, ((0, 0), (0, 0), (1, 1), (1, 1)))        # (N, C, H+2, W+2)
    xph = xp.reshape(n, c_in, hh, 2, wh, 2)
    xph = jnp.transpose(xph, (0, 3, 5, 2, 4, 1))                  # (N, 2, 2, hh, wh, C)
    xph = xph.reshape(n, 4 * hh, wh, c_in)                        # phase p at rows p*hh

    in_specs = [pl.BlockSpec((nb, 4 * hh, wh, c_in), lambda i: (i, 0, 0, 0))] + [
        _whole_spec(params[k].shape)
        for k in ("wdw1", "s1", "b1", "wpw1", "s2", "b2",
                  "wdw2", "s3", "b3", "wpw2", "s4", "b4")
    ]

    y = pl.pallas_call(
        _fused_block_kernel,
        out_shape=jax.ShapeDtypeStruct((n, h1, w1, c2), jnp.float32),
        grid=(n // nb,),
        in_specs=in_specs,
        out_specs=pl.BlockSpec((nb, h1, w1, c2), lambda i: (i, 0, 0, 0)),
        scratch_shapes=[pltpu.VMEM((nb, h1 + 2, _HALO_L + w1 + 8, c2), jnp.float32)],
        # Per-step VMEM footprint here is a few hundred KiB, far under the default
        # scoped limit on every generation, so no vmem_limit override is needed.
        # (For large-tile v6e builds raise it; keep <=32 MiB for v7x's 64 MiB VMEM.)
        compiler_params=pltpu.CompilerParams(
            dimension_semantics=("parallel",)),
    )(xph, params["wdw1"], params["s1"], params["b1"], params["wpw1"],
      params["s2"], params["b2"], params["wdw2"], params["s3"], params["b3"],
      params["wpw2"], params["s4"], params["b4"])

    return jnp.transpose(y, (0, 3, 1, 2))                         # NHWC -> NCHW


# -----------------------------------------------------------------------------
# Parameter construction (synthetic, matches nn.Module shapes).  BN in eval mode
# folded to (scale, bias).  Weights stay at their real channel counts.
# -----------------------------------------------------------------------------
def _fold_bn(gamma, beta, mean, var, eps=1e-5):
    scale = gamma / jnp.sqrt(var + eps)
    bias = beta - mean * scale
    return scale, bias


def make_params(key, in_ch, out_ch):
    ks = jax.random.split(key, 8)
    w_dw1 = jax.random.normal(ks[0], (in_ch, 1, 3, 3), jnp.float32) * 0.3
    w_pw1 = jax.random.normal(ks[1], (out_ch, in_ch, 1, 1), jnp.float32) * 0.3
    w_dw2 = jax.random.normal(ks[2], (out_ch, 1, 3, 3), jnp.float32) * 0.3
    w_pw2 = jax.random.normal(ks[3], (out_ch, out_ch, 1, 1), jnp.float32) * 0.3

    def bn_params(k, c):
        k1, k2, k3, k4 = jax.random.split(k, 4)
        gamma = 1.0 + 0.2 * jax.random.normal(k1, (c,), jnp.float32)
        beta = 0.2 * jax.random.normal(k2, (c,), jnp.float32)
        mean = 0.2 * jax.random.normal(k3, (c,), jnp.float32)
        var = jax.random.uniform(k4, (c,), jnp.float32, 0.5, 1.5)
        return gamma, beta, mean, var

    s1, b1 = _fold_bn(*bn_params(ks[4], in_ch))
    s2, b2 = _fold_bn(*bn_params(ks[5], out_ch))
    s3, b3 = _fold_bn(*bn_params(ks[6], out_ch))
    s4, b4 = _fold_bn(*bn_params(ks[7], out_ch))

    def pack_dw(w_t):                     # (C,1,3,3) -> (9, 1, C), tap k = di*3 + dj
        c = w_t.shape[0]
        return w_t.reshape(c, 9).T.reshape(9, 1, c)

    def pack_pw(w_t):                     # (Co,Ci,1,1) -> (Ci, Co) bf16
        return w_t[:, :, 0, 0].T.astype(jnp.bfloat16)

    params = {
        "wdw1": pack_dw(w_dw1), "wpw1": pack_pw(w_pw1),
        "wdw2": pack_dw(w_dw2), "wpw2": pack_pw(w_pw2),
        "s1": s1.reshape(1, -1), "b1": b1.reshape(1, -1),
        "s2": s2.reshape(1, -1), "b2": b2.reshape(1, -1),
        "s3": s3.reshape(1, -1), "b3": b3.reshape(1, -1),
        "s4": s4.reshape(1, -1), "b4": b4.reshape(1, -1),
    }
    torch_form = {
        "w_dw1": w_dw1, "w_pw1": w_pw1, "w_dw2": w_dw2, "w_pw2": w_pw2,
        "s1": s1, "b1": b1, "s2": s2, "b2": b2,
        "s3": s3, "b3": b3, "s4": s4, "b4": b4,
    }
    return params, torch_form


# -----------------------------------------------------------------------------
# Pure-JAX (XLA) reference of the PyTorch forward (eval-mode BN), NCHW, f32.
# -----------------------------------------------------------------------------
def reference_forward(x, tf):
    prec = lax.Precision.HIGHEST

    def dwconv(x, w, stride):
        return lax.conv_general_dilated(
            x, w, window_strides=(stride, stride), padding=((1, 1), (1, 1)),
            feature_group_count=x.shape[1],
            dimension_numbers=("NCHW", "OIHW", "NCHW"), precision=prec)

    def pwconv(x, w):
        return lax.conv_general_dilated(
            x, w, window_strides=(1, 1), padding="VALID",
            dimension_numbers=("NCHW", "OIHW", "NCHW"), precision=prec)

    def bn_relu6(x, s, b):
        return jnp.clip(x * s[None, :, None, None] + b[None, :, None, None],
                        0.0, 6.0)

    out = bn_relu6(dwconv(x, tf["w_dw1"], 2), tf["s1"], tf["b1"])
    out = bn_relu6(pwconv(out, tf["w_pw1"]), tf["s2"], tf["b2"])
    out = bn_relu6(dwconv(out, tf["w_dw2"], 1), tf["s3"], tf["b3"])
    out = bn_relu6(pwconv(out, tf["w_pw2"]), tf["s4"], tf["b4"])
    return out


if __name__ == "__main__":
    key = jax.random.PRNGKey(0)
    k_x, k_p = jax.random.split(key)

    batch, in_ch, out_ch, hw = 2, 4, 8, 16
    x = jax.random.normal(k_x, (batch, in_ch, hw, hw), jnp.float32)

    params, torch_form = make_params(k_p, in_ch, out_ch)

    out = depthwise_separable_forward(x, params, out_channels=out_ch)
    out = jax.block_until_ready(out)

    ref = jax.block_until_ready(reference_forward(x, torch_form))

    assert out.shape == (batch, out_ch, hw // 2, hw // 2), out.shape
    # bf16 MXU inputs (f32 accumulation) bound the error to ~1e-2 at these channel
    # counts; 5e-2 keeps margin vs. the f32 HIGHEST-precision reference.
    err = float(jnp.max(jnp.abs(out - ref)))
    assert err < 5e-2, err

    print("KERNEL_OK")
</pallas_src>

<mosaic_0001>
module attributes {stable_mosaic.version = 11 : i64} {
  func.func @_fused_block_kernel(%arg0: i32, %arg1: memref<2x36x9x4xf32, #tpu.memory_space<vmem>>, %arg2: memref<9x1x4xf32, #tpu.memory_space<vmem>>, %arg3: memref<1x4xf32, #tpu.memory_space<vmem>>, %arg4: memref<1x4xf32, #tpu.memory_space<vmem>>, %arg5: memref<4x8xbf16, #tpu.memory_space<vmem>>, %arg6: memref<1x8xf32, #tpu.memory_space<vmem>>, %arg7: memref<1x8xf32, #tpu.memory_space<vmem>>, %arg8: memref<9x1x8xf32, #tpu.memory_space<vmem>>, %arg9: memref<1x8xf32, #tpu.memory_space<vmem>>, %arg10: memref<1x8xf32, #tpu.memory_space<vmem>>, %arg11: memref<8x8xbf16, #tpu.memory_space<vmem>>, %arg12: memref<1x8xf32, #tpu.memory_space<vmem>>, %arg13: memref<1x8xf32, #tpu.memory_space<vmem>>, %arg14: memref<2x8x8x8xf32, #tpu.memory_space<vmem>>, %arg15: memref<2x10x24x8xf32, #tpu.memory_space<vmem>>) attributes {dimension_semantics = [#tpu.dimension_semantics<parallel>], iteration_bounds = array<i64: 1>, scalar_prefetch = 0 : i64, scratch_operands = 1 : i64, tpu.core_type = #tpu.core_type<tc>, window_params = [{transform_indices = @transform_0, window_bounds = array<i64: 2, 36, 9, 4>}, {pipeline_mode = #tpu.pipeline_mode<synchronous>, transform_indices = @transform_1, window_bounds = array<i64: 9, 1, 4>}, {pipeline_mode = #tpu.pipeline_mode<synchronous>, transform_indices = @transform_2, window_bounds = array<i64: 1, 4>}, {pipeline_mode = #tpu.pipeline_mode<synchronous>, transform_indices = @transform_3, window_bounds = array<i64: 1, 4>}, {pipeline_mode = #tpu.pipeline_mode<synchronous>, transform_indices = @transform_4, window_bounds = array<i64: 4, 8>}, {pipeline_mode = #tpu.pipeline_mode<synchronous>, transform_indices = @transform_5, window_bounds = array<i64: 1, 8>}, {pipeline_mode = #tpu.pipeline_mode<synchronous>, transform_indices = @transform_6, window_bounds = array<i64: 1, 8>}, {pipeline_mode = #tpu.pipeline_mode<synchronous>, transform_indices = @transform_7, window_bounds = array<i64: 9, 1, 8>}, {pipeline_mode = #tpu.pipeline_mode<synchronous>, transform_indices = @transform_8, window_bounds = array<i64: 1, 8>}, {pipeline_mode = #tpu.pipeline_mode<synchronous>, transform_indices = @transform_9, window_bounds = array<i64: 1, 8>}, {pipeline_mode = #tpu.pipeline_mode<synchronous>, transform_indices = @transform_10, window_bounds = array<i64: 8, 8>}, {pipeline_mode = #tpu.pipeline_mode<synchronous>, transform_indices = @transform_11, window_bounds = array<i64: 1, 8>}, {pipeline_mode = #tpu.pipeline_mode<synchronous>, transform_indices = @transform_12, window_bounds = array<i64: 1, 8>}, {transform_indices = @transform_13, window_bounds = array<i64: 2, 8, 8, 8>}]} {
    %c0 = arith.constant 0 : index
    %c0_0 = arith.constant 0 : index
    %c0_1 = arith.constant 0 : index
    %0 = vector.load %arg2[%c0, %c0_0, %c0_1] : memref<9x1x4xf32, #tpu.memory_space<vmem>>, vector<9x1x4xf32>
    %c0_2 = arith.constant 0 : index
    %c0_3 = arith.constant 0 : index
    %c0_4 = arith.constant 0 : index
    %c0_5 = arith.constant 0 : index
    %1 = vector.load %arg1[%c0_2, %c0_3, %c0_4, %c0_5] : memref<2x36x9x4xf32, #tpu.memory_space<vmem>>, vector<2x8x8x4xf32>
    %2 = vector.extract_strided_slice %0 {offsets = [0, 0, 0], sizes = [1, 1, 4], strides = [1, 1, 1]} : vector<9x1x4xf32> to vector<1x1x4xf32>
    %3 = vector.shape_cast %2 : vector<1x1x4xf32> to vector<1x4xf32>
    %4 = vector.shape_cast %3 : vector<1x4xf32> to vector<1x1x1x4xf32>
    %5 = vector.broadcast %4 : vector<1x1x1x4xf32> to vector<2x8x8x4xf32>
    %6 = arith.mulf %1, %5 : vector<2x8x8x4xf32>
    %c0_6 = arith.constant 0 : index
    %c9 = arith.constant 9 : index
    %c0_7 = arith.constant 0 : index
    %c0_8 = arith.constant 0 : index
    %7 = vector.load %arg1[%c0_6, %c9, %c0_7, %c0_8] : memref<2x36x9x4xf32, #tpu.memory_space<vmem>>, vector<2x8x8x4xf32>
    %8 = vector.extract_strided_slice %0 {offsets = [1, 0, 0], sizes = [1, 1, 4], strides = [1, 1, 1]} : vector<9x1x4xf32> to vector<1x1x4xf32>
    %9 = vector.shape_cast %8 : vector<1x1x4xf32> to vector<1x4xf32>
    %10 = vector.shape_cast %9 : vector<1x4xf32> to vector<1x1x1x4xf32>
    %11 = vector.broadcast %10 : vector<1x1x1x4xf32> to vector<2x8x8x4xf32>
    %12 = arith.mulf %7, %11 : vector<2x8x8x4xf32>
    %c0_9 = arith.constant 0 : index
    %c0_10 = arith.constant 0 : index
    %c1 = arith.constant 1 : index
    %c0_11 = arith.constant 0 : index
    %13 = vector.load %arg1[%c0_9, %c0_10, %c1, %c0_11] : memref<2x36x9x4xf32, #tpu.memory_space<vmem>>, vector<2x8x8x4xf32>
    %14 = vector.extract_strided_slice %0 {offsets = [2, 0, 0], sizes = [1, 1, 4], strides = [1, 1, 1]} : vector<9x1x4xf32> to vector<1x1x4xf32>
    %15 = vector.shape_cast %14 : vector<1x1x4xf32> to vector<1x4xf32>
    %16 = vector.shape_cast %15 : vector<1x4xf32> to vector<1x1x1x4xf32>
    %17 = vector.broadcast %16 : vector<1x1x1x4xf32> to vector<2x8x8x4xf32>
    %18 = arith.mulf %13, %17 : vector<2x8x8x4xf32>
    %c0_12 = arith.constant 0 : index
    %c18 = arith.constant 18 : index
    %c0_13 = arith.constant 0 : index
    %c0_14 = arith.constant 0 : index
    %19 = vector.load %arg1[%c0_12, %c18, %c0_13, %c0_14] : memref<2x36x9x4xf32, #tpu.memory_space<vmem>>, vector<2x8x8x4xf32>
    %20 = vector.extract_strided_slice %0 {offsets = [3, 0, 0], sizes = [1, 1, 4], strides = [1, 1, 1]} : vector<9x1x4xf32> to vector<1x1x4xf32>
    %21 = vector.shape_cast %20 : vector<1x1x4xf32> to vector<1x4xf32>
    %22 = vector.shape_cast %21 : vector<1x4xf32> to vector<1x1x1x4xf32>
    %23 = vector.broadcast %22 : vector<1x1x1x4xf32> to vector<2x8x8x4xf32>
    %24 = arith.mulf %19, %23 : vector<2x8x8x4xf32>
    %c0_15 = arith.constant 0 : index
    %c27 = arith.constant 27 : index
    %c0_16 = arith.constant 0 : index
    %c0_17 = arith.constant 0 : index
    %25 = vector.load %arg1[%c0_15, %c27, %c0_16, %c0_17] : memref<2x36x9x4xf32, #tpu.memory_space<vmem>>, vector<2x8x8x4xf32>
    %26 = vector.extract_strided_slice %0 {offsets = [4, 0, 0], sizes = [1, 1, 4], strides = [1, 1, 1]} : vector<9x1x4xf32> to vector<1x1x4xf32>
    %27 = vector.shape_cast %26 : vector<1x1x4xf32> to vector<1x4xf32>
    %28 = vector.shape_cast %27 : vector<1x4xf32> to vector<1x1x1x4xf32>
    %29 = vector.broadcast %28 : vector<1x1x1x4xf32> to vector<2x8x8x4xf32>
    %30 = arith.mulf %25, %29 : vector<2x8x8x4xf32>
    %c0_18 = arith.constant 0 : index
    %c18_19 = arith.constant 18 : index
    %c1_20 = arith.constant 1 : index
    %c0_21 = arith.constant 0 : index
    %31 = vector.load %arg1[%c0_18, %c18_19, %c1_20, %c0_21] : memref<2x36x9x4xf32, #tpu.memory_space<vmem>>, vector<2x8x8x4xf32>
    %32 = vector.extract_strided_slice %0 {offsets = [5, 0, 0], sizes = [1, 1, 4], strides = [1, 1, 1]} : vector<9x1x4xf32> to vector<1x1x4xf32>
    %33 = vector.shape_cast %32 : vector<1x1x4xf32> to vector<1x4xf32>
    %34 = vector.shape_cast %33 : vector<1x4xf32> to vector<1x1x1x4xf32>
    %35 = vector.broadcast %34 : vector<1x1x1x4xf32> to vector<2x8x8x4xf32>
    %36 = arith.mulf %31, %35 : vector<2x8x8x4xf32>
    %c0_22 = arith.constant 0 : index
    %c1_23 = arith.constant 1 : index
    %c0_24 = arith.constant 0 : index
    %c0_25 = arith.constant 0 : index
    %37 = vector.load %arg1[%c0_22, %c1_23, %c0_24, %c0_25] : memref<2x36x9x4xf32, #tpu.memory_space<vmem>>, vector<2x8x8x4xf32>
    %38 = vector.extract_strided_slice %0 {offsets = [6, 0, 0], sizes = [1, 1, 4], strides = [1, 1, 1]} : vector<9x1x4xf32> to vector<1x1x4xf32>
    %39 = vector.shape_cast %38 : vector<1x1x4xf32> to vector<1x4xf32>
    %40 = vector.shape_cast %39 : vector<1x4xf32> to vector<1x1x1x4xf32>
    %41 = vector.broadcast %40 : vector<1x1x1x4xf32> to vector<2x8x8x4xf32>
    %42 = arith.mulf %37, %41 : vector<2x8x8x4xf32>
    %c0_26 = arith.constant 0 : index
    %c10 = arith.constant 10 : index
    %c0_27 = arith.constant 0 : index
    %c0_28 = arith.constant 0 : index
    %43 = vector.load %arg1[%c0_26, %c10, %c0_27, %c0_28] : memref<2x36x9x4xf32, #tpu.memory_space<vmem>>, vector<2x8x8x4xf32>
    %44 = vector.extract_strided_slice %0 {offsets = [7, 0, 0], sizes = [1, 1, 4], strides = [1, 1, 1]} : vector<9x1x4xf32> to vector<1x1x4xf32>
    %45 = vector.shape_cast %44 : vector<1x1x4xf32> to vector<1x4xf32>
    %46 = vector.shape_cast %45 : vector<1x4xf32> to vector<1x1x1x4xf32>
    %47 = vector.broadcast %46 : vector<1x1x1x4xf32> to vector<2x8x8x4xf32>
    %48 = arith.mulf %43, %47 : vector<2x8x8x4xf32>
    %c0_29 = arith.constant 0 : index
    %c1_30 = arith.constant 1 : index
    %c1_31 = arith.constant 1 : index
    %c0_32 = arith.constant 0 : index
    %49 = vector.load %arg1[%c0_29, %c1_30, %c1_31, %c0_32] : memref<2x36x9x4xf32, #tpu.memory_space<vmem>>, vector<2x8x8x4xf32>
    %50 = vector.extract_strided_slice %0 {offsets = [8, 0, 0], sizes = [1, 1, 4], strides = [1, 1, 1]} : vector<9x1x4xf32> to vector<1x1x4xf32>
    %51 = vector.shape_cast %50 : vector<1x1x4xf32> to vector<1x4xf32>
    %52 = vector.shape_cast %51 : vector<1x4xf32> to vector<1x1x1x4xf32>
    %53 = vector.broadcast %52 : vector<1x1x1x4xf32> to vector<2x8x8x4xf32>
    %54 = arith.mulf %49, %53 : vector<2x8x8x4xf32>
    %55 = arith.addf %6, %12 : vector<2x8x8x4xf32>
    %56 = arith.addf %18, %24 : vector<2x8x8x4xf32>
    %57 = arith.addf %30, %36 : vector<2x8x8x4xf32>
    %58 = arith.addf %42, %48 : vector<2x8x8x4xf32>
    %59 = arith.addf %55, %56 : vector<2x8x8x4xf32>
    %60 = arith.addf %57, %58 : vector<2x8x8x4xf32>
    %61 = arith.addf %59, %60 : vector<2x8x8x4xf32>
    %62 = arith.addf %61, %54 : vector<2x8x8x4xf32>
    %c0_33 = arith.constant 0 : index
    %c0_34 = arith.constant 0 : index
    %63 = vector.load %arg3[%c0_33, %c0_34] : memref<1x4xf32, #tpu.memory_space<vmem>>, vector<1x4xf32>
    %64 = vector.shape_cast %63 : vector<1x4xf32> to vector<1x1x1x4xf32>
    %65 = vector.broadcast %64 : vector<1x1x1x4xf32> to vector<2x8x8x4xf32>
    %66 = arith.mulf %62, %65 : vector<2x8x8x4xf32>
    %c0_35 = arith.constant 0 : index
    %c0_36 = arith.constant 0 : index
    %67 = vector.load %arg4[%c0_35, %c0_36] : memref<1x4xf32, #tpu.memory_space<vmem>>, vector<1x4xf32>
    %68 = vector.shape_cast %67 : vector<1x4xf32> to vector<1x1x1x4xf32>
    %69 = vector.broadcast %68 : vector<1x1x1x4xf32> to vector<2x8x8x4xf32>
    %70 = arith.addf %66, %69 : vector<2x8x8x4xf32>
    %cst = arith.constant 0.000000e+00 : f32
    %cst_37 = arith.constant 6.000000e+00 : f32
    %71 = vector.broadcast %cst : f32 to vector<2x8x8x4xf32>
    %72 = arith.maximumf %71, %70 : vector<2x8x8x4xf32>
    %73 = vector.broadcast %cst_37 : f32 to vector<2x8x8x4xf32>
    %74 = arith.minimumf %73, %72 : vector<2x8x8x4xf32>
    %75 = vector.shape_cast %74 : vector<2x8x8x4xf32> to vector<128x4xf32>
    %76 = arith.truncf %75 : vector<128x4xf32> to vector<128x4xbf16>
    %c0_38 = arith.constant 0 : index
    %c0_39 = arith.constant 0 : index
    %77 = vector.load %arg5[%c0_38, %c0_39] : memref<4x8xbf16, #tpu.memory_space<vmem>>, vector<4x8xbf16>
    %cst_40 = arith.constant dense<0.000000e+00> : vector<128x8xf32>
    %78 = tpu.matmul %76, %77, %cst_40 {dimension_numbers = #tpu.dot_dimension_numbers<[1], [0], [0], [1], [0, 0, 1, 1], [], []>} : vector<128x4xbf16>, vector<4x8xbf16>, vector<128x8xf32> -> vector<128x8xf32>
    %c0_41 = arith.constant 0 : index
    %c0_42 = arith.constant 0 : index
    %79 = vector.load %arg6[%c0_41, %c0_42] : memref<1x8xf32, #tpu.memory_space<vmem>>, vector<1x8xf32>
    %80 = vector.broadcast %79 : vector<1x8xf32> to vector<128x8xf32>
    %81 = arith.mulf %78, %80 : vector<128x8xf32>
    %c0_43 = arith.constant 0 : index
    %c0_44 = arith.constant 0 : index
    %82 = vector.load %arg7[%c0_43, %c0_44] : memref<1x8xf32, #tpu.memory_space<vmem>>, vector<1x8xf32>
    %83 = vector.broadcast %82 : vector<1x8xf32> to vector<128x8xf32>
    %84 = arith.addf %81, %83 : vector<128x8xf32>
    %cst_45 = arith.constant 0.000000e+00 : f32
    %cst_46 = arith.constant 6.000000e+00 : f32
    %85 = vector.broadcast %cst_45 : f32 to vector<128x8xf32>
    %86 = arith.maximumf %85, %84 : vector<128x8xf32>
    %87 = vector.broadcast %cst_46 : f32 to vector<128x8xf32>
    %88 = arith.minimumf %87, %86 : vector<128x8xf32>
    %cst_47 = arith.constant 0.000000e+00 : f32
    %89 = vector.broadcast %cst_47 : f32 to vector<2x1x24x8xf32>
    %c0_48 = arith.constant 0 : index
    %c0_49 = arith.constant 0 : index
    %c0_50 = arith.constant 0 : index
    %c0_51 = arith.constant 0 : index
    %90 = vector.load %arg15[%c0_48, %c0_49, %c0_50, %c0_51] : memref<2x10x24x8xf32, #tpu.memory_space<vmem>>, vector<2x1x24x8xf32>
    tpu.vector_store %arg15[%c0_48, %c0_49, %c0_50, %c0_51], %89 {strides = array<i32>} : memref<2x10x24x8xf32, #tpu.memory_space<vmem>>, vector<2x1x24x8xf32>,
    %c0_52 = arith.constant 0 : index
    %c9_53 = arith.constant 9 : index
    %c0_54 = arith.constant 0 : index
    %c0_55 = arith.constant 0 : index
    %91 = vector.load %arg15[%c0_52, %c9_53, %c0_54, %c0_55] : memref<2x10x24x8xf32, #tpu.memory_space<vmem>>, vector<2x1x24x8xf32>
    tpu.vector_store %arg15[%c0_52, %c9_53, %c0_54, %c0_55], %89 {strides = array<i32>} : memref<2x10x24x8xf32, #tpu.memory_space<vmem>>, vector<2x1x24x8xf32>,
    %cst_56 = arith.constant 0.000000e+00 : f32
    %92 = vector.broadcast %cst_56 : f32 to vector<2x10x8x8xf32>
    %c0_57 = arith.constant 0 : index
    %c0_58 = arith.constant 0 : index
    %c0_59 = arith.constant 0 : index
    %c0_60 = arith.constant 0 : index
    %93 = vector.load %arg15[%c0_57, %c0_58, %c0_59, %c0_60] : memref<2x10x24x8xf32, #tpu.memory_space<vmem>>, vector<2x10x8x8xf32>
    tpu.vector_store %arg15[%c0_57, %c0_58, %c0_59, %c0_60], %92 {strides = array<i32>} : memref<2x10x24x8xf32, #tpu.memory_space<vmem>>, vector<2x10x8x8xf32>,
    %cst_61 = arith.constant 0.000000e+00 : f32
    %94 = vector.broadcast %cst_61 : f32 to vector<2x10x8x8xf32>
    %c0_62 = arith.constant 0 : index
    %c0_63 = arith.constant 0 : index
    %c16 = arith.constant 16 : index
    %c0_64 = arith.constant 0 : index
    %95 = vector.load %arg15[%c0_62, %c0_63, %c16, %c0_64] : memref<2x10x24x8xf32, #tpu.memory_space<vmem>>, vector<2x10x8x8xf32>
    tpu.vector_store %arg15[%c0_62, %c0_63, %c16, %c0_64], %94 {strides = array<i32>} : memref<2x10x24x8xf32, #tpu.memory_space<vmem>>, vector<2x10x8x8xf32>,
    %96 = vector.shape_cast %88 : vector<128x8xf32> to vector<2x8x8x8xf32>
    %c0_65 = arith.constant 0 : index
    %c1_66 = arith.constant 1 : index
    %c8 = arith.constant 8 : index
    %c0_67 = arith.constant 0 : index
    %97 = vector.load %arg15[%c0_65, %c1_66, %c8, %c0_67] : memref<2x10x24x8xf32, #tpu.memory_space<vmem>>, vector<2x8x8x8xf32>
    tpu.vector_store %arg15[%c0_65, %c1_66, %c8, %c0_67], %96 {strides = array<i32>} : memref<2x10x24x8xf32, #tpu.memory_space<vmem>>, vector<2x8x8x8xf32>,
    %c0_68 = arith.constant 0 : index
    %c0_69 = arith.constant 0 : index
    %c0_70 = arith.constant 0 : index
    %98 = vector.load %arg8[%c0_68, %c0_69, %c0_70] : memref<9x1x8xf32, #tpu.memory_space<vmem>>, vector<9x1x8xf32>
    %c0_71 = arith.constant 0 : index
    %c0_72 = arith.constant 0 : index
    %c7 = arith.constant 7 : index
    %c0_73 = arith.constant 0 : index
    %99 = vector.load %arg15[%c0_71, %c0_72, %c7, %c0_73] : memref<2x10x24x8xf32, #tpu.memory_space<vmem>>, vector<2x8x8x8xf32>
    %100 = vector.extract_strided_slice %98 {offsets = [0, 0, 0], sizes = [1, 1, 8], strides = [1, 1, 1]} : vector<9x1x8xf32> to vector<1x1x8xf32>
    %101 = vector.shape_cast %100 : vector<1x1x8xf32> to vector<1x8xf32>
    %102 = vector.shape_cast %101 : vector<1x8xf32> to vector<1x1x1x8xf32>
    %103 = vector.broadcast %102 : vector<1x1x1x8xf32> to vector<2x8x8x8xf32>
    %104 = arith.mulf %99, %103 : vector<2x8x8x8xf32>
    %c0_74 = arith.constant 0 : index
    %c0_75 = arith.constant 0 : index
    %c8_76 = arith.constant 8 : index
    %c0_77 = arith.constant 0 : index
    %105 = vector.load %arg15[%c0_74, %c0_75, %c8_76, %c0_77] : memref<2x10x24x8xf32, #tpu.memory_space<vmem>>, vector<2x8x8x8xf32>
    %106 = vector.extract_strided_slice %98 {offsets = [1, 0, 0], sizes = [1, 1, 8], strides = [1, 1, 1]} : vector<9x1x8xf32> to vector<1x1x8xf32>
    %107 = vector.shape_cast %106 : vector<1x1x8xf32> to vector<1x8xf32>
    %108 = vector.shape_cast %107 : vector<1x8xf32> to vector<1x1x1x8xf32>
    %109 = vector.broadcast %108 : vector<1x1x1x8xf32> to vector<2x8x8x8xf32>
    %110 = arith.mulf %105, %109 : vector<2x8x8x8xf32>
    %c0_78 = arith.constant 0 : index
    %c0_79 = arith.constant 0 : index
    %c9_80 = arith.constant 9 : index
    %c0_81 = arith.constant 0 : index
    %111 = vector.load %arg15[%c0_78, %c0_79, %c9_80, %c0_81] : memref<2x10x24x8xf32, #tpu.memory_space<vmem>>, vector<2x8x8x8xf32>
    %112 = vector.extract_strided_slice %98 {offsets = [2, 0, 0], sizes = [1, 1, 8], strides = [1, 1, 1]} : vector<9x1x8xf32> to vector<1x1x8xf32>
    %113 = vector.shape_cast %112 : vector<1x1x8xf32> to vector<1x8xf32>
    %114 = vector.shape_cast %113 : vector<1x8xf32> to vector<1x1x1x8xf32>
    %115 = vector.broadcast %114 : vector<1x1x1x8xf32> to vector<2x8x8x8xf32>
    %116 = arith.mulf %111, %115 : vector<2x8x8x8xf32>
    %c0_82 = arith.constant 0 : index
    %c1_83 = arith.constant 1 : index
    %c7_84 = arith.constant 7 : index
    %c0_85 = arith.constant 0 : index
    %117 = vector.load %arg15[%c0_82, %c1_83, %c7_84, %c0_85] : memref<2x10x24x8xf32, #tpu.memory_space<vmem>>, vector<2x8x8x8xf32>
    %118 = vector.extract_strided_slice %98 {offsets = [3, 0, 0], sizes = [1, 1, 8], strides = [1, 1, 1]} : vector<9x1x8xf32> to vector<1x1x8xf32>
    %119 = vector.shape_cast %118 : vector<1x1x8xf32> to vector<1x8xf32>
    %120 = vector.shape_cast %119 : vector<1x8xf32> to vector<1x1x1x8xf32>
    %121 = vector.broadcast %120 : vector<1x1x1x8xf32> to vector<2x8x8x8xf32>
    %122 = arith.mulf %117, %121 : vector<2x8x8x8xf32>
    %c0_86 = arith.constant 0 : index
    %c1_87 = arith.constant 1 : index
    %c8_88 = arith.constant 8 : index
    %c0_89 = arith.constant 0 : index
    %123 = vector.load %arg15[%c0_86, %c1_87, %c8_88, %c0_89] : memref<2x10x24x8xf32, #tpu.memory_space<vmem>>, vector<2x8x8x8xf32>
    %124 = vector.extract_strided_slice %98 {offsets = [4, 0, 0], sizes = [1, 1, 8], strides = [1, 1, 1]} : vector<9x1x8xf32> to vector<1x1x8xf32>
    %125 = vector.shape_cast %124 : vector<1x1x8xf32> to vector<1x8xf32>
    %126 = vector.shape_cast %125 : vector<1x8xf32> to vector<1x1x1x8xf32>
    %127 = vector.broadcast %126 : vector<1x1x1x8xf32> to vector<2x8x8x8xf32>
    %128 = arith.mulf %123, %127 : vector<2x8x8x8xf32>
    %c0_90 = arith.constant 0 : index
    %c1_91 = arith.constant 1 : index
    %c9_92 = arith.constant 9 : index
    %c0_93 = arith.constant 0 : index
    %129 = vector.load %arg15[%c0_90, %c1_91, %c9_92, %c0_93] : memref<2x10x24x8xf32, #tpu.memory_space<vmem>>, vector<2x8x8x8xf32>
    %130 = vector.extract_strided_slice %98 {offsets = [5, 0, 0], sizes = [1, 1, 8], strides = [1, 1, 1]} : vector<9x1x8xf32> to vector<1x1x8xf32>
    %131 = vector.shape_cast %130 : vector<1x1x8xf32> to vector<1x8xf32>
    %132 = vector.shape_cast %131 : vector<1x8xf32> to vector<1x1x1x8xf32>
    %133 = vector.broadcast %132 : vector<1x1x1x8xf32> to vector<2x8x8x8xf32>
    %134 = arith.mulf %129, %133 : vector<2x8x8x8xf32>
    %c0_94 = arith.constant 0 : index
    %c2 = arith.constant 2 : index
    %c7_95 = arith.constant 7 : index
    %c0_96 = arith.constant 0 : index
    %135 = vector.load %arg15[%c0_94, %c2, %c7_95, %c0_96] : memref<2x10x24x8xf32, #tpu.memory_space<vmem>>, vector<2x8x8x8xf32>
    %136 = vector.extract_strided_slice %98 {offsets = [6, 0, 0], sizes = [1, 1, 8], strides = [1, 1, 1]} : vector<9x1x8xf32> to vector<1x1x8xf32>
    %137 = vector.shape_cast %136 : vector<1x1x8xf32> to vector<1x8xf32>
    %138 = vector.shape_cast %137 : vector<1x8xf32> to vector<1x1x1x8xf32>
    %139 = vector.broadcast %138 : vector<1x1x1x8xf32> to vector<2x8x8x8xf32>
    %140 = arith.mulf %135, %139 : vector<2x8x8x8xf32>
    %c0_97 = arith.constant 0 : index
    %c2_98 = arith.constant 2 : index
    %c8_99 = arith.constant 8 : index
    %c0_100 = arith.constant 0 : index
    %141 = vector.load %arg15[%c0_97, %c2_98, %c8_99, %c0_100] : memref<2x10x24x8xf32, #tpu.memory_space<vmem>>, vector<2x8x8x8xf32>
    %142 = vector.extract_strided_slice %98 {offsets = [7, 0, 0], sizes = [1, 1, 8], strides = [1, 1, 1]} : vector<9x1x8xf32> to vector<1x1x8xf32>
    %143 = vector.shape_cast %142 : vector<1x1x8xf32> to vector<1x8xf32>
    %144 = vector.shape_cast %143 : vector<1x8xf32> to vector<1x1x1x8xf32>
    %145 = vector.broadcast %144 : vector<1x1x1x8xf32> to vector<2x8x8x8xf32>
    %146 = arith.mulf %141, %145 : vector<2x8x8x8xf32>
    %c0_101 = arith.constant 0 : index
    %c2_102 = arith.constant 2 : index
    %c9_103 = arith.constant 9 : index
    %c0_104 = arith.constant 0 : index
    %147 = vector.load %arg15[%c0_101, %c2_102, %c9_103, %c0_104] : memref<2x10x24x8xf32, #tpu.memory_space<vmem>>, vector<2x8x8x8xf32>
    %148 = vector.extract_strided_slice %98 {offsets = [8, 0, 0], sizes = [1, 1, 8], strides = [1, 1, 1]} : vector<9x1x8xf32> to vector<1x1x8xf32>
    %149 = vector.shape_cast %148 : vector<1x1x8xf32> to vector<1x8xf32>
    %150 = vector.shape_cast %149 : vector<1x8xf32> to vector<1x1x1x8xf32>
    %151 = vector.broadcast %150 : vector<1x1x1x8xf32> to vector<2x8x8x8xf32>
    %152 = arith.mulf %147, %151 : vector<2x8x8x8xf32>
    %153 = arith.addf %104, %110 : vector<2x8x8x8xf32>
    %154 = arith.addf %116, %122 : vector<2x8x8x8xf32>
    %155 = arith.addf %128, %134 : vector<2x8x8x8xf32>
    %156 = arith.addf %140, %146 : vector<2x8x8x8xf32>
    %157 = arith.addf %153, %154 : vector<2x8x8x8xf32>
    %158 = arith.addf %155, %156 : vector<2x8x8x8xf32>
    %159 = arith.addf %157, %158 : vector<2x8x8x8xf32>
    %160 = arith.addf %159, %152 : vector<2x8x8x8xf32>
    %c0_105 = arith.constant 0 : index
    %c0_106 = arith.constant 0 : index
    %161 = vector.load %arg9[%c0_105, %c0_106] : memref<1x8xf32, #tpu.memory_space<vmem>>, vector<1x8xf32>
    %162 = vector.shape_cast %161 : vector<1x8xf32> to vector<1x1x1x8xf32>
    %163 = vector.broadcast %162 : vector<1x1x1x8xf32> to vector<2x8x8x8xf32>
    %164 = arith.mulf %160, %163 : vector<2x8x8x8xf32>
    %c0_107 = arith.constant 0 : index
    %c0_108 = arith.constant 0 : index
    %165 = vector.load %arg10[%c0_107, %c0_108] : memref<1x8xf32, #tpu.memory_space<vmem>>, vector<1x8xf32>
    %166 = vector.shape_cast %165 : vector<1x8xf32> to vector<1x1x1x8xf32>
    %167 = vector.broadcast %166 : vector<1x1x1x8xf32> to vector<2x8x8x8xf32>
    %168 = arith.addf %164, %167 : vector<2x8x8x8xf32>
    %cst_109 = arith.constant 0.000000e+00 : f32
    %cst_110 = arith.constant 6.000000e+00 : f32
    %169 = vector.broadcast %cst_109 : f32 to vector<2x8x8x8xf32>
    %170 = arith.maximumf %169, %168 : vector<2x8x8x8xf32>
    %171 = vector.broadcast %cst_110 : f32 to vector<2x8x8x8xf32>
    %172 = arith.minimumf %171, %170 : vector<2x8x8x8xf32>
    %173 = vector.shape_cast %172 : vector<2x8x8x8xf32> to vector<128x8xf32>
    %174 = arith.truncf %173 : vector<128x8xf32> to vector<128x8xbf16>
    %c0_111 = arith.constant 0 : index
    %c0_112 = arith.constant 0 : index
    %175 = vector.load %arg11[%c0_111, %c0_112] : memref<8x8xbf16, #tpu.memory_space<vmem>>, vector<8x8xbf16>
    %cst_113 = arith.constant dense<0.000000e+00> : vector<128x8xf32>
    %176 = tpu.matmul %174, %175, %cst_113 {dimension_numbers = #tpu.dot_dimension_numbers<[1], [0], [0], [1], [0, 0, 1, 1], [], []>} : vector<128x8xbf16>, vector<8x8xbf16>, vector<128x8xf32> -> vector<128x8xf32>
    %c0_114 = arith.constant 0 : index
    %c0_115 = arith.constant 0 : index
    %177 = vector.load %arg12[%c0_114, %c0_115] : memref<1x8xf32, #tpu.memory_space<vmem>>, vector<1x8xf32>
    %178 = vector.broadcast %177 : vector<1x8xf32> to vector<128x8xf32>
    %179 = arith.mulf %176, %178 : vector<128x8xf32>
    %c0_116 = arith.constant 0 : index
    %c0_117 = arith.constant 0 : index
    %180 = vector.load %arg13[%c0_116, %c0_117] : memref<1x8xf32, #tpu.memory_space<vmem>>, vector<1x8xf32>
    %181 = vector.broadcast %180 : vector<1x8xf32> to vector<128x8xf32>
    %182 = arith.addf %179, %181 : vector<128x8xf32>
    %cst_118 = arith.constant 0.000000e+00 : f32
    %cst_119 = arith.constant 6.000000e+00 : f32
    %183 = vector.broadcast %cst_118 : f32 to vector<128x8xf32>
    %184 = arith.maximumf %183, %182 : vector<128x8xf32>
    %185 = vector.broadcast %cst_119 : f32 to vector<128x8xf32>
    %186 = arith.minimumf %185, %184 : vector<128x8xf32>
    %187 = vector.shape_cast %186 : vector<128x8xf32> to vector<2x8x8x8xf32>
    %c0_120 = arith.constant 0 : index
    %c0_121 = arith.constant 0 : index
    %c0_122 = arith.constant 0 : index
    %c0_123 = arith.constant 0 : index
    %188 = vector.load %arg14[%c0_120, %c0_121, %c0_122, %c0_123] : memref<2x8x8x8xf32, #tpu.memory_space<vmem>>, vector<2x8x8x8xf32>
    tpu.vector_store %arg14[%c0_120, %c0_121, %c0_122, %c0_123], %187 {strides = array<i32>} : memref<2x8x8x8xf32, #tpu.memory_space<vmem>>, vector<2x8x8x8xf32>,
    return
  }
  func.func @transform_0(%arg0: i32) -> (i32, i32, i32, i32) {
    %c0_i32 = arith.constant 0 : i32
    %c0_i32_0 = arith.constant 0 : i32
    %c0_i32_1 = arith.constant 0 : i32
    %c0_i32_2 = arith.constant 0 : i32
    return %arg0, %c0_i32, %c0_i32_0, %c0_i32_1 : i32, i32, i32, i32
  }
  func.func @transform_1(%arg0: i32) -> (i32, i32, i32) {
    %c0_i32 = arith.constant 0 : i32
    %c0_i32_0 = arith.constant 0 : i32
    %c0_i32_1 = arith.constant 0 : i32
    %c0_i32_2 = arith.constant 0 : i32
    return %c0_i32, %c0_i32_0, %c0_i32_1 : i32, i32, i32
  }
  func.func @transform_2(%arg0: i32) -> (i32, i32) {
    %c0_i32 = arith.constant 0 : i32
    %c0_i32_0 = arith.constant 0 : i32
    %c0_i32_1 = arith.constant 0 : i32
    return %c0_i32, %c0_i32_0 : i32, i32
  }
  func.func @transform_3(%arg0: i32) -> (i32, i32) {
    %c0_i32 = arith.constant 0 : i32
    %c0_i32_0 = arith.constant 0 : i32
    %c0_i32_1 = arith.constant 0 : i32
    return %c0_i32, %c0_i32_0 : i32, i32
  }
  func.func @transform_4(%arg0: i32) -> (i32, i32) {
    %c0_i32 = arith.constant 0 : i32
    %c0_i32_0 = arith.constant 0 : i32
    %c0_i32_1 = arith.constant 0 : i32
    return %c0_i32, %c0_i32_0 : i32, i32
  }
  func.func @transform_5(%arg0: i32) -> (i32, i32) {
    %c0_i32 = arith.constant 0 : i32
    %c0_i32_0 = arith.constant 0 : i32
    %c0_i32_1 = arith.constant 0 : i32
    return %c0_i32, %c0_i32_0 : i32, i32
  }
  func.func @transform_6(%arg0: i32) -> (i32, i32) {
    %c0_i32 = arith.constant 0 : i32
    %c0_i32_0 = arith.constant 0 : i32
    %c0_i32_1 = arith.constant 0 : i32
    return %c0_i32, %c0_i32_0 : i32, i32
  }
  func.func @transform_7(%arg0: i32) -> (i32, i32, i32) {
    %c0_i32 = arith.constant 0 : i32
    %c0_i32_0 = arith.constant 0 : i32
    %c0_i32_1 = arith.constant 0 : i32
    %c0_i32_2 = arith.constant 0 : i32
    return %c0_i32, %c0_i32_0, %c0_i32_1 : i32, i32, i32
  }
  func.func @transform_8(%arg0: i32) -> (i32, i32) {
    %c0_i32 = arith.constant 0 : i32
    %c0_i32_0 = arith.constant 0 : i32
    %c0_i32_1 = arith.constant 0 : i32
    return %c0_i32, %c0_i32_0 : i32, i32
  }
  func.func @transform_9(%arg0: i32) -> (i32, i32) {
    %c0_i32 = arith.constant 0 : i32
    %c0_i32_0 = arith.constant 0 : i32
    %c0_i32_1 = arith.constant 0 : i32
    return %c0_i32, %c0_i32_0 : i32, i32
  }
  func.func @transform_10(%arg0: i32) -> (i32, i32) {
    %c0_i32 = arith.constant 0 : i32
    %c0_i32_0 = arith.constant 0 : i32
    %c0_i32_1 = arith.constant 0 : i32
    return %c0_i32, %c0_i32_0 : i32, i32
  }
  func.func @transform_11(%arg0: i32) -> (i32, i32) {
    %c0_i32 = arith.constant 0 : i32
    %c0_i32_0 = arith.constant 0 : i32
    %c0_i32_1 = arith.constant 0 : i32
    return %c0_i32, %c0_i32_0 : i32, i32
  }
  func.func @transform_12(%arg0: i32) -> (i32, i32) {
    %c0_i32 = arith.constant 0 : i32
    %c0_i32_0 = arith.constant 0 : i32
    %c0_i32_1 = arith.constant 0 : i32
    return %c0_i32, %c0_i32_0 : i32, i32
  }
  func.func @transform_13(%arg0: i32) -> (i32, i32, i32, i32) {
    %c0_i32 = arith.constant 0 : i32
    %c0_i32_0 = arith.constant 0 : i32
    %c0_i32_1 = arith.constant 0 : i32
    %c0_i32_2 = arith.constant 0 : i32
    return %arg0, %c0_i32, %c0_i32_0, %c0_i32_1 : i32, i32, i32, i32
  }
}

</mosaic_0001>

<llo_original>
// kernel: depthwise_separable_forward.1
$region0: #{depthwise_separable_forward.1}
  #allocation0 [shape = 'u32[]', space=smem, size = 0x4, offset = 0x4, fixed_abs, tag = 'smem constant byte address 0x4 - core index']
  #allocation1 [shape = 'u32[144,128]{1,0:T(1,128)}', space=vmem, size = 0x12000, scoped, tag = 'internal scratch']
  #allocation2 [shape = 'f32[2,10,24,8]{3,2,1,0:T(8,128)}', space=vmem, size = 0x3c000, scoped, tag = 'scratch operand']
  %s0 = inlined_call_operand.vmem [shape: f32[2,36,9,4], index: 0, kind: input, shape index: {}]
  %s1 = inlined_call_operand.vmem [shape: f32[9,1,4], index: 1, kind: input, shape index: {}]
  %s2 = inlined_call_operand.vmem [shape: f32[1,4], index: 2, kind: input, shape index: {}]
  %s3 = inlined_call_operand.vmem [shape: f32[1,4], index: 3, kind: input, shape index: {}]
  %s4 = inlined_call_operand.vmem [shape: bf16[4,8], index: 4, kind: input, shape index: {}]
  %s5 = inlined_call_operand.vmem [shape: f32[1,8], index: 5, kind: input, shape index: {}]
  %s6 = inlined_call_operand.vmem [shape: f32[1,8], index: 6, kind: input, shape index: {}]
  %s7 = inlined_call_operand.vmem [shape: f32[9,1,8], index: 7, kind: input, shape index: {}]
  %s8 = inlined_call_operand.vmem [shape: f32[1,8], index: 8, kind: input, shape index: {}]
  %s9 = inlined_call_operand.vmem [shape: f32[1,8], index: 9, kind: input, shape index: {}]
  %s10 = inlined_call_operand.vmem [shape: bf16[8,8], index: 10, kind: input, shape index: {}]
  %s11 = inlined_call_operand.vmem [shape: f32[1,8], index: 11, kind: input, shape index: {}]
  %s12 = inlined_call_operand.vmem [shape: f32[1,8], index: 12, kind: input, shape index: {}]
  %s13 = inlined_call_operand.vmem [shape: f32[2,8,8,8], index: 13, kind: output, shape index: {}]
  %s14 = sld [smem:[#allocation0]]
  $region62: #{depthwise_separable_forward.1} parent=0
    _
  %s16 = ssub.s32 1, %s14
  %s17 = scalar_select 0, %s16, %s14
  // Predicated region
  $region2: #{depthwise_separable_forward.1} parent=0 // pred_check
    _
  $region3: #{depthwise_separable_forward.1} parent=0 // pred_check_branch
    %19 = sbr.rel (0) target = $region5
  $region4: #{depthwise_separable_forward.1} parent=0 // pred_region
    _
  $region5: #{depthwise_separable_forward.1} parent=0 // pred_fallthru
    _
  // Predicated region
  $region6: #{depthwise_separable_forward.1} parent=0 // pred_check
    _
  $region7: #{depthwise_separable_forward.1} parent=0 // pred_check_branch
    %21 = sbr.rel (0) target = $region9
  $region8: #{depthwise_separable_forward.1} parent=0 // pred_region
    _
  $region9: #{depthwise_separable_forward.1} parent=0 // pred_fallthru
    _
  // Predicated region
  $region10: #{depthwise_separable_forward.1} parent=0 // pred_check
    _
  $region11: #{depthwise_separable_forward.1} parent=0 // pred_check_branch
    %23 = sbr.rel (0) target = $region13
  $region12: #{depthwise_separable_forward.1} parent=0 // pred_region
    _
  $region13: #{depthwise_separable_forward.1} parent=0 // pred_fallthru
    _
  // Predicated region
  $region14: #{depthwise_separable_forward.1} parent=0 // pred_check
    _
  $region15: #{depthwise_separable_forward.1} parent=0 // pred_check_branch
    %25 = sbr.rel (0) target = $region17
  $region16: #{depthwise_separable_forward.1} parent=0 // pred_region
    _
  $region17: #{depthwise_separable_forward.1} parent=0 // pred_fallthru
    _
  // Predicated region
  $region18: #{depthwise_separable_forward.1} parent=0 // pred_check
    _
  $region19: #{depthwise_separable_forward.1} parent=0 // pred_check_branch
    %27 = sbr.rel (0) target = $region21
  $region20: #{depthwise_separable_forward.1} parent=0 // pred_region
    _
  $region21: #{depthwise_separable_forward.1} parent=0 // pred_fallthru
    _
  // Predicated region
  $region22: #{depthwise_separable_forward.1} parent=0 // pred_check
    _
  $region23: #{depthwise_separable_forward.1} parent=0 // pred_check_branch
    %29 = sbr.rel (0) target = $region25
  $region24: #{depthwise_separable_forward.1} parent=0 // pred_region
    _
  $region25: #{depthwise_separable_forward.1} parent=0 // pred_fallthru
    _
  // Predicated region
  $region26: #{depthwise_separable_forward.1} parent=0 // pred_check
    _
  $region27: #{depthwise_separable_forward.1} parent=0 // pred_check_branch
    %31 = sbr.rel (0) target = $region29
  $region28: #{depthwise_separable_forward.1} parent=0 // pred_region
    _
  $region29: #{depthwise_separable_forward.1} parent=0 // pred_fallthru
    _
  // Predicated region
  $region30: #{depthwise_separable_forward.1} parent=0 // pred_check
    _
  $region31: #{depthwise_separable_forward.1} parent=0 // pred_check_branch
    %33 = sbr.rel (0) target = $region33
  $region32: #{depthwise_separable_forward.1} parent=0 // pred_region
    _
  $region33: #{depthwise_separable_forward.1} parent=0 // pred_fallthru
    _
  // Predicated region
  $region34: #{depthwise_separable_forward.1} parent=0 // pred_check
    _
  $region35: #{depthwise_separable_forward.1} parent=0 // pred_check_branch
    %35 = sbr.rel (0) target = $region37
  $region36: #{depthwise_separable_forward.1} parent=0 // pred_region
    _
  $region37: #{depthwise_separable_forward.1} parent=0 // pred_fallthru
    _
  // Predicated region
  $region38: #{depthwise_separable_forward.1} parent=0 // pred_check
    _
  $region39: #{depthwise_separable_forward.1} parent=0 // pred_check_branch
    %37 = sbr.rel (0) target = $region41
  $region40: #{depthwise_separable_forward.1} parent=0 // pred_region
    _
  $region41: #{depthwise_separable_forward.1} parent=0 // pred_fallthru
    _
  // Predicated region
  $region42: #{depthwise_separable_forward.1} parent=0 // pred_check
    _
  $region43: #{depthwise_separable_forward.1} parent=0 // pred_check_branch
    %39 = sbr.rel (0) target = $region45
  $region44: #{depthwise_separable_forward.1} parent=0 // pred_region
    _
  $region45: #{depthwise_separable_forward.1} parent=0 // pred_fallthru
    _
  // Predicated region
  $region46: #{depthwise_separable_forward.1} parent=0 // pred_check
    _
  $region47: #{depthwise_separable_forward.1} parent=0 // pred_check_branch
    %41 = sbr.rel (0) target = $region49
  $region48: #{depthwise_separable_forward.1} parent=0 // pred_region
    _
  $region49: #{depthwise_separable_forward.1} parent=0 // pred_fallthru
    _
  // Predicated region
  $region50: #{depthwise_separable_forward.1} parent=0 // pred_check
    _
  $region51: #{depthwise_separable_forward.1} parent=0 // pred_check_branch
    %43 = sbr.rel (0) target = $region53
  $region52: #{depthwise_separable_forward.1} parent=0 // pred_region
    _
  $region53: #{depthwise_separable_forward.1} parent=0 // pred_fallthru
    _
  %v45 = vld [vmem:[%s1] sm:$0x1]
  %v46 = vld [vmem:[%s1 + $0x1] sm:$0x1]
  %v47 = vld [vmem:[%s1 + $0x2] sm:$0x1]
  %v48 = vld [vmem:[%s1 + $0x3] sm:$0x1]
  %v49 = vld [vmem:[%s1 + $0x4] sm:$0x1]
  %v50 = vld [vmem:[%s1 + $0x5] sm:$0x1]
  %v51 = vld [vmem:[%s1 + $0x6] sm:$0x1]
  %v52 = vld [vmem:[%s1 + $0x7] sm:$0x1]
  %v53 = vld [vmem:[%s1 + $0x8] sm:$0x1]
  %v54 = vld [vmem:[%s0] sm:$0xff]
  %v55 = vld [vmem:[%s0 + $0x10] sm:$0xff]
  %v56 = vld [vmem:[%s0 + $0x20] sm:$0xff]
  %v57 = vld [vmem:[%s0 + $0x30] sm:$0xff]
  %v58 = vld [vmem:[%s0 + $0x40] sm:$0xff]
  %v59 = vld [vmem:[%s0 + $0x50] sm:$0xff]
  %v60 = vld [vmem:[%s0 + $0x60] sm:$0xff]
  %v61 = vld [vmem:[%s0 + $0x70] sm:$0xff]
  %v62 = vld [vmem:[%s0 + $0x240] sm:$0xff]
  %v63 = vld [vmem:[%s0 + $0x250] sm:$0xff]
  %v64 = vld [vmem:[%s0 + $0x260] sm:$0xff]
  %v65 = vld [vmem:[%s0 + $0x270] sm:$0xff]
  %v66 = vld [vmem:[%s0 + $0x280] sm:$0xff]
  %v67 = vld [vmem:[%s0 + $0x290] sm:$0xff]
  %v68 = vld [vmem:[%s0 + $0x2a0] sm:$0xff]
  %v69 = vld [vmem:[%s0 + $0x2b0] sm:$0xff]
  %v71 = vlaneseq
  %v72 = vshrl.u32 %v71, 7
  %v73 = vsub.s32 0, %v72
  %v74 = vrot.slane %v45, %v73
  %v76 = vmul.f32 %v54, %v74
  %v77 = vmul.f32 %v55, %v74
  %v78 = vmul.f32 %v56, %v74
  %v79 = vmul.f32 %v57, %v74
  %v80 = vmul.f32 %v58, %v74
  %v81 = vmul.f32 %v59, %v74
  %v82 = vmul.f32 %v60, %v74
  %v83 = vmul.f32 %v61, %v74
  %v84 = vmul.f32 %v62, %v74
  %v85 = vmul.f32 %v63, %v74
  %v86 = vmul.f32 %v64, %v74
  %v87 = vmul.f32 %v65, %v74
  %v88 = vmul.f32 %v66, %v74
  %v89 = vmul.f32 %v67, %v74
  %v90 = vmul.f32 %v68, %v74
  %v91 = vmul.f32 %v69, %v74
  %s92 = scalar_lea.vmem %s0, 144
  %v93 = vld [vmem:[%s92] sm:$0xff]
  %v94 = vld [vmem:[%s92 + $0x10] sm:$0xff]
  %v95 = vld [vmem:[%s92 + $0x20] sm:$0xff]
  %v96 = vld [vmem:[%s92 + $0x30] sm:$0xff]
  %v97 = vld [vmem:[%s92 + $0x40] sm:$0xff]
  %v98 = vld [vmem:[%s92 + $0x50] sm:$0xff]
  %v99 = vld [vmem:[%s92 + $0x60] sm:$0xff]
  %v100 = vld [vmem:[%s92 + $0x70] sm:$0xff]
  %v101 = vld [vmem:[%s92 + $0x240] sm:$0xff]
  %v102 = vld [vmem:[%s92 + $0x250] sm:$0xff]
  %v103 = vld [vmem:[%s92 + $0x260] sm:$0xff]
  %v104 = vld [vmem:[%s92 + $0x270] sm:$0xff]
  %v105 = vld [vmem:[%s92 + $0x280] sm:$0xff]
  %v106 = vld [vmem:[%s92 + $0x290] sm:$0xff]
  %v107 = vld [vmem:[%s92 + $0x2a0] sm:$0xff]
  %v108 = vld [vmem:[%s92 + $0x2b0] sm:$0xff]
  %v110 = vlaneseq
  %v111 = vshrl.u32 %v110, 7
  %v112 = vsub.s32 0, %v111
  %v113 = vrot.slane %v46, %v112
  %v115 = vmul.f32 %v93, %v113
  %v116 = vmul.f32 %v94, %v113
  %v117 = vmul.f32 %v95, %v113
  %v118 = vmul.f32 %v96, %v113
  %v119 = vmul.f32 %v97, %v113
  %v120 = vmul.f32 %v98, %v113
  %v121 = vmul.f32 %v99, %v113
  %v122 = vmul.f32 %v100, %v113
  %v123 = vmul.f32 %v101, %v113
  %v124 = vmul.f32 %v102, %v113
  %v125 = vmul.f32 %v103, %v113
  %v126 = vmul.f32 %v104, %v113
  %v127 = vmul.f32 %v105, %v113
  %v128 = vmul.f32 %v106, %v113
  %v129 = vmul.f32 %v107, %v113
  %v130 = vmul.f32 %v108, %v113
  %v131 = vld [vmem:[%s0 + $0x1] sm:$0xff]
  %v132 = vld [vmem:[%s0 + $0x11] sm:$0xff]
  %v133 = vld [vmem:[%s0 + $0x21] sm:$0xff]
  %v134 = vld [vmem:[%s0 + $0x31] sm:$0xff]
  %v135 = vld [vmem:[%s0 + $0x41] sm:$0xff]
  %v136 = vld [vmem:[%s0 + $0x51] sm:$0xff]
  %v137 = vld [vmem:[%s0 + $0x61] sm:$0xff]
  %v138 = vld [vmem:[%s0 + $0x71] sm:$0xff]
  %v139 = vld [vmem:[%s0 + $0x241] sm:$0xff]
  %v140 = vld [vmem:[%s0 + $0x251] sm:$0xff]
  %v141 = vld [vmem:[%s0 + $0x261] sm:$0xff]
  %v142 = vld [vmem:[%s0 + $0x271] sm:$0xff]
  %v143 = vld [vmem:[%s0 + $0x281] sm:$0xff]
  %v144 = vld [vmem:[%s0 + $0x291] sm:$0xff]
  %v145 = vld [vmem:[%s0 + $0x2a1] sm:$0xff]
  %v146 = vld [vmem:[%s0 + $0x2b1] sm:$0xff]
  %v148 = vlaneseq
  %v149 = vshrl.u32 %v148, 7
  %v150 = vsub.s32 0, %v149
  %v151 = vrot.slane %v47, %v150
  %v153 = vmul.f32 %v131, %v151
  %v154 = vmul.f32 %v132, %v151
  %v155 = vmul.f32 %v133, %v151
  %v156 = vmul.f32 %v134, %v151
  %v157 = vmul.f32 %v135, %v151
  %v158 = vmul.f32 %v136, %v151
  %v159 = vmul.f32 %v137, %v151
  %v160 = vmul.f32 %v138, %v151
  %v161 = vmul.f32 %v139, %v151
  %v162 = vmul.f32 %v140, %v151
  %v163 = vmul.f32 %v141, %v151
  %v164 = vmul.f32 %v142, %v151
  %v165 = vmul.f32 %v143, %v151
  %v166 = vmul.f32 %v144, %v151
  %v167 = vmul.f32 %v145, %v151
  %v168 = vmul.f32 %v146, %v151
  %s169 = scalar_lea.vmem %s0, 288
  %v170 = vld [vmem:[%s169] sm:$0xff]
  %v171 = vld [vmem:[%s169 + $0x10] sm:$0xff]
  %v172 = vld [vmem:[%s169 + $0x20] sm:$0xff]
  %v173 = vld [vmem:[%s169 + $0x30] sm:$0xff]
  %v174 = vld [vmem:[%s169 + $0x40] sm:$0xff]
  %v175 = vld [vmem:[%s169 + $0x50] sm:$0xff]
  %v176 = vld [vmem:[%s169 + $0x60] sm:$0xff]
  %v177 = vld [vmem:[%s169 + $0x70] sm:$0xff]
  %v178 = vld [vmem:[%s169 + $0x240] sm:$0xff]
  %v179 = vld [vmem:[%s169 + $0x250] sm:$0xff]
  %v180 = vld [vmem:[%s169 + $0x260] sm:$0xff]
  %v181 = vld [vmem:[%s169 + $0x270] sm:$0xff]
  %v182 = vld [vmem:[%s169 + $0x280] sm:$0xff]
  %v183 = vld [vmem:[%s169 + $0x290] sm:$0xff]
  %v184 = vld [vmem:[%s169 + $0x2a0] sm:$0xff]
  %v185 = vld [vmem:[%s169 + $0x2b0] sm:$0xff]
  %v187 = vlaneseq
  %v188 = vshrl.u32 %v187, 7
  %v189 = vsub.s32 0, %v188
  %v190 = vrot.slane %v48, %v189
  %v192 = vmul.f32 %v170, %v190
  %v193 = vmul.f32 %v171, %v190
  %v194 = vmul.f32 %v172, %v190
  %v195 = vmul.f32 %v173, %v190
  %v196 = vmul.f32 %v174, %v190
  %v197 = vmul.f32 %v175, %v190
  %v198 = vmul.f32 %v176, %v190
  %v199 = vmul.f32 %v177, %v190
  %v200 = vmul.f32 %v178, %v190
  %v201 = vmul.f32 %v179, %v190
  %v202 = vmul.f32 %v180, %v190
  %v203 = vmul.f32 %v181, %v190
  %v204 = vmul.f32 %v182, %v190
  %v205 = vmul.f32 %v183, %v190
  %v206 = vmul.f32 %v184, %v190
  %v207 = vmul.f32 %v185, %v190
  %s208 = scalar_lea.vmem %s0, 432
  %v209 = vld [vmem:[%s208] sm:$0xff]
  %v210 = vld [vmem:[%s208 + $0x10] sm:$0xff]
  %v211 = vld [vmem:[%s208 + $0x20] sm:$0xff]
  %v212 = vld [vmem:[%s208 + $0x30] sm:$0xff]
  %v213 = vld [vmem:[%s208 + $0x40] sm:$0xff]
  %v214 = vld [vmem:[%s208 + $0x50] sm:$0xff]
  %v215 = vld [vmem:[%s208 + $0x60] sm:$0xff]
  %v216 = vld [vmem:[%s208 + $0x70] sm:$0xff]
  %v217 = vld [vmem:[%s208 + $0x240] sm:$0xff]
  %v218 = vld [vmem:[%s208 + $0x250] sm:$0xff]
  %v219 = vld [vmem:[%s208 + $0x260] sm:$0xff]
  %v220 = vld [vmem:[%s208 + $0x270] sm:$0xff]
  %v221 = vld [vmem:[%s208 + $0x280] sm:$0xff]
  %v222 = vld [vmem:[%s208 + $0x290] sm:$0xff]
  %v223 = vld [vmem:[%s208 + $0x2a0] sm:$0xff]
  %v224 = vld [vmem:[%s208 + $0x2b0] sm:$0xff]
  %v226 = vlaneseq
  %v227 = vshrl.u32 %v226, 7
  %v228 = vsub.s32 0, %v227
  %v229 = vrot.slane %v49, %v228
  %v231 = vmul.f32 %v209, %v229
  %v232 = vmul.f32 %v210, %v229
  %v233 = vmul.f32 %v211, %v229
  %v234 = vmul.f32 %v212, %v229
  %v235 = vmul.f32 %v213, %v229
  %v236 = vmul.f32 %v214, %v229
  %v237 = vmul.f32 %v215, %v229
  %v238 = vmul.f32 %v216, %v229
  %v239 = vmul.f32 %v217, %v229
  %v240 = vmul.f32 %v218, %v229
  %v241 = vmul.f32 %v219, %v229
  %v242 = vmul.f32 %v220, %v229
  %v243 = vmul.f32 %v221, %v229
  %v244 = vmul.f32 %v222, %v229
  %v245 = vmul.f32 %v223, %v229
  %v246 = vmul.f32 %v224, %v229
  %v247 = vld [vmem:[%s169 + $0x1] sm:$0xff]
  %v248 = vld [vmem:[%s169 + $0x11] sm:$0xff]
  %v249 = vld [vmem:[%s169 + $0x21] sm:$0xff]
  %v250 = vld [vmem:[%s169 + $0x31] sm:$0xff]
  %v251 = vld [vmem:[%s169 + $0x41] sm:$0xff]
  %v252 = vld [vmem:[%s169 + $0x51] sm:$0xff]
  %v253 = vld [vmem:[%s169 + $0x61] sm:$0xff]
  %v254 = vld [vmem:[%s169 + $0x71] sm:$0xff]
  %v255 = vld [vmem:[%s169 + $0x241] sm:$0xff]
  %v256 = vld [vmem:[%s169 + $0x251] sm:$0xff]
  %v257 = vld [vmem:[%s169 + $0x261] sm:$0xff]
  %v258 = vld [vmem:[%s169 + $0x271] sm:$0xff]
  %v259 = vld [vmem:[%s169 + $0x281] sm:$0xff]
  %v260 = vld [vmem:[%s169 + $0x291] sm:$0xff]
  %v261 = vld [vmem:[%s169 + $0x2a1] sm:$0xff]
  %v262 = vld [vmem:[%s169 + $0x2b1] sm:$0xff]
  %v264 = vlaneseq
  %v265 = vshrl.u32 %v264, 7
  %v266 = vsub.s32 0, %v265
  %v267 = vrot.slane %v50, %v266
  %v269 = vmul.f32 %v247, %v267
  %v270 = vmul.f32 %v248, %v267
  %v271 = vmul.f32 %v249, %v267
  %v272 = vmul.f32 %v250, %v267
  %v273 = vmul.f32 %v251, %v267
  %v274 = vmul.f32 %v252, %v267
  %v275 = vmul.f32 %v253, %v267
  %v276 = vmul.f32 %v254, %v267
  %v277 = vmul.f32 %v255, %v267
  %v278 = vmul.f32 %v256, %v267
  %v279 = vmul.f32 %v257, %v267
  %v280 = vmul.f32 %v258, %v267
  %v281 = vmul.f32 %v259, %v267
  %v282 = vmul.f32 %v260, %v267
  %v283 = vmul.f32 %v261, %v267
  %v284 = vmul.f32 %v262, %v267
  %s285 = scalar_lea.vmem %s0, 16
  %v286 = vld [vmem:[%s285] sm:$0xff]
  %v287 = vld [vmem:[%s285 + $0x10] sm:$0xff]
  %v288 = vld [vmem:[%s285 + $0x20] sm:$0xff]
  %v289 = vld [vmem:[%s285 + $0x30] sm:$0xff]
  %v290 = vld [vmem:[%s285 + $0x40] sm:$0xff]
  %v291 = vld [vmem:[%s285 + $0x50] sm:$0xff]
  %v292 = vld [vmem:[%s285 + $0x60] sm:$0xff]
  %v293 = vld [vmem:[%s285 + $0x70] sm:$0xff]
  %v294 = vld [vmem:[%s285 + $0x240] sm:$0xff]
  %v295 = vld [vmem:[%s285 + $0x250] sm:$0xff]
  %v296 = vld [vmem:[%s285 + $0x260] sm:$0xff]
  %v297 = vld [vmem:[%s285 + $0x270] sm:$0xff]
  %v298 = vld [vmem:[%s285 + $0x280] sm:$0xff]
  %v299 = vld [vmem:[%s285 + $0x290] sm:$0xff]
  %v300 = vld [vmem:[%s285 + $0x2a0] sm:$0xff]
  %v301 = vld [vmem:[%s285 + $0x2b0] sm:$0xff]
  %v303 = vlaneseq
  %v304 = vshrl.u32 %v303, 7
  %v305 = vsub.s32 0, %v304
  %v306 = vrot.slane %v51, %v305
  %v308 = vmul.f32 %v286, %v306
  %v309 = vmul.f32 %v287, %v306
  %v310 = vmul.f32 %v288, %v306
  %v311 = vmul.f32 %v289, %v306
  %v312 = vmul.f32 %v290, %v306
  %v313 = vmul.f32 %v291, %v306
  %v314 = vmul.f32 %v292, %v306
  %v315 = vmul.f32 %v293, %v306
  %v316 = vmul.f32 %v294, %v306
  %v317 = vmul.f32 %v295, %v306
  %v318 = vmul.f32 %v296, %v306
  %v319 = vmul.f32 %v297, %v306
  %v320 = vmul.f32 %v298, %v306
  %v321 = vmul.f32 %v299, %v306
  %v322 = vmul.f32 %v300, %v306
  %v323 = vmul.f32 %v301, %v306
  %s324 = scalar_lea.vmem %s0, 160
  %v325 = vld [vmem:[%s324] sm:$0xff]
  %v326 = vld [vmem:[%s324 + $0x10] sm:$0xff]
  %v327 = vld [vmem:[%s324 + $0x20] sm:$0xff]
  %v328 = vld [vmem:[%s324 + $0x30] sm:$0xff]
  %v329 = vld [vmem:[%s324 + $0x40] sm:$0xff]
  %v330 = vld [vmem:[%s324 + $0x50] sm:$0xff]
  %v331 = vld [vmem:[%s324 + $0x60] sm:$0xff]
  %v332 = vld [vmem:[%s324 + $0x70] sm:$0xff]
  %v333 = vld [vmem:[%s324 + $0x240] sm:$0xff]
  %v334 = vld [vmem:[%s324 + $0x250] sm:$0xff]
  %v335 = vld [vmem:[%s324 + $0x260] sm:$0xff]
  %v336 = vld [vmem:[%s324 + $0x270] sm:$0xff]
  %v337 = vld [vmem:[%s324 + $0x280] sm:$0xff]
  %v338 = vld [vmem:[%s324 + $0x290] sm:$0xff]
  %v339 = vld [vmem:[%s324 + $0x2a0] sm:$0xff]
  %v340 = vld [vmem:[%s324 + $0x2b0] sm:$0xff]
  %v342 = vlaneseq
  %v343 = vshrl.u32 %v342, 7
  %v344 = vsub.s32 0, %v343
  %v345 = vrot.slane %v52, %v344
  %v347 = vmul.f32 %v325, %v345
  %v348 = vmul.f32 %v326, %v345
  %v349 = vmul.f32 %v327, %v345
  %v350 = vmul.f32 %v328, %v345
  %v351 = vmul.f32 %v329, %v345
  %v352 = vmul.f32 %v330, %v345
  %v353 = vmul.f32 %v331, %v345
  %v354 = vmul.f32 %v332, %v345
  %v355 = vmul.f32 %v333, %v345
  %v356 = vmul.f32 %v334, %v345
  %v357 = vmul.f32 %v335, %v345
  %v358 = vmul.f32 %v336, %v345
  %v359 = vmul.f32 %v337, %v345
  %v360 = vmul.f32 %v338, %v345
  %v361 = vmul.f32 %v339, %v345
  %v362 = vmul.f32 %v340, %v345
  %v363 = vld [vmem:[%s285 + $0x1] sm:$0xff]
  %v364 = vld [vmem:[%s285 + $0x11] sm:$0xff]
  %v365 = vld [vmem:[%s285 + $0x21] sm:$0xff]
  %v366 = vld [vmem:[%s285 + $0x31] sm:$0xff]
  %v367 = vld [vmem:[%s285 + $0x41] sm:$0xff]
  %v368 = vld [vmem:[%s285 + $0x51] sm:$0xff]
  %v369 = vld [vmem:[%s285 + $0x61] sm:$0xff]
  %v370 = vld [vmem:[%s285 + $0x71] sm:$0xff]
  %v371 = vld [vmem:[%s285 + $0x241] sm:$0xff]
  %v372 = vld [vmem:[%s285 + $0x251] sm:$0xff]
  %v373 = vld [vmem:[%s285 + $0x261] sm:$0xff]
  %v374 = vld [vmem:[%s285 + $0x271] sm:$0xff]
  %v375 = vld [vmem:[%s285 + $0x281] sm:$0xff]
  %v376 = vld [vmem:[%s285 + $0x291] sm:$0xff]
  %v377 = vld [vmem:[%s285 + $0x2a1] sm:$0xff]
  %v378 = vld [vmem:[%s285 + $0x2b1] sm:$0xff]
  %v380 = vlaneseq
  %v381 = vshrl.u32 %v380, 7
  %v382 = vsub.s32 0, %v381
  %v383 = vrot.slane %v53, %v382
  %v385 = vmul.f32 %v363, %v383
  %v386 = vmul.f32 %v364, %v383
  %v387 = vmul.f32 %v365, %v383
  %v388 = vmul.f32 %v366, %v383
  %v389 = vmul.f32 %v367, %v383
  %v390 = vmul.f32 %v368, %v383
  %v391 = vmul.f32 %v369, %v383
  %v392 = vmul.f32 %v370, %v383
  %v393 = vmul.f32 %v371, %v383
  %v394 = vmul.f32 %v372, %v383
  %v395 = vmul.f32 %v373, %v383
  %v396 = vmul.f32 %v374, %v383
  %v397 = vmul.f32 %v375, %v383
  %v398 = vmul.f32 %v376, %v383
  %v399 = vmul.f32 %v377, %v383
  %v400 = vmul.f32 %v378, %v383
  %v401 = vadd.f32 %v76, %v115
  %v402 = vadd.f32 %v77, %v116
  %v403 = vadd.f32 %v78, %v117
  %v404 = vadd.f32 %v79, %v118
  %v405 = vadd.f32 %v80, %v119
  %v406 = vadd.f32 %v81, %v120
  %v407 = vadd.f32 %v82, %v121
  %v408 = vadd.f32 %v83, %v122
  %v409 = vadd.f32 %v84, %v123
  %v410 = vadd.f32 %v85, %v124
  %v411 = vadd.f32 %v86, %v125
  %v412 = vadd.f32 %v87, %v126
  %v413 = vadd.f32 %v88, %v127
  %v414 = vadd.f32 %v89, %v128
  %v415 = vadd.f32 %v90, %v129
  %v416 = vadd.f32 %v91, %v130
  %v417 = vadd.f32 %v153, %v192
  %v418 = vadd.f32 %v154, %v193
  %v419 = vadd.f32 %v155, %v194
  %v420 = vadd.f32 %v156, %v195
  %v421 = vadd.f32 %v157, %v196
  %v422 = vadd.f32 %v158, %v197
  %v423 = vadd.f32 %v159, %v198
  %v424 = vadd.f32 %v160, %v199
  %v425 = vadd.f32 %v161, %v200
  %v426 = vadd.f32 %v162, %v201
  %v427 = vadd.f32 %v163, %v202
  %v428 = vadd.f32 %v164, %v203
  %v429 = vadd.f32 %v165, %v204
  %v430 = vadd.f32 %v166, %v205
  %v431 = vadd.f32 %v167, %v206
  %v432 = vadd.f32 %v168, %v207
  %v433 = vadd.f32 %v231, %v269
  %v434 = vadd.f32 %v232, %v270
  %v435 = vadd.f32 %v233, %v271
  %v436 = vadd.f32 %v234, %v272
  %v437 = vadd.f32 %v235, %v273
  %v438 = vadd.f32 %v236, %v274
  %v439 = vadd.f32 %v237, %v275
  %v440 = vadd.f32 %v238, %v276
  %v441 = vadd.f32 %v239, %v277
  %v442 = vadd.f32 %v240, %v278
  %v443 = vadd.f32 %v241, %v279
  %v444 = vadd.f32 %v242, %v280
  %v445 = vadd.f32 %v243, %v281
  %v446 = vadd.f32 %v244, %v282
  %v447 = vadd.f32 %v245, %v283
  %v448 = vadd.f32 %v246, %v284
  %v449 = vadd.f32 %v308, %v347
  %v450 = vadd.f32 %v309, %v348
  %v451 = vadd.f32 %v310, %v349
  %v452 = vadd.f32 %v311, %v350
  %v453 = vadd.f32 %v312, %v351
  %v454 = vadd.f32 %v313, %v352
  %v455 = vadd.f32 %v314, %v353
  %v456 = vadd.f32 %v315, %v354
  %v457 = vadd.f32 %v316, %v355
  %v458 = vadd.f32 %v317, %v356
  %v459 = vadd.f32 %v318, %v357
  %v460 = vadd.f32 %v319, %v358
  %v461 = vadd.f32 %v320, %v359
  %v462 = vadd.f32 %v321, %v360
  %v463 = vadd.f32 %v322, %v361
  %v464 = vadd.f32 %v323, %v362
  %v465 = vadd.f32 %v401, %v417
  %v466 = vadd.f32 %v402, %v418
  %v467 = vadd.f32 %v403, %v419
  %v468 = vadd.f32 %v404, %v420
  %v469 = vadd.f32 %v405, %v421
  %v470 = vadd.f32 %v406, %v422
  %v471 = vadd.f32 %v407, %v423
  %v472 = vadd.f32 %v408, %v424
  %v473 = vadd.f32 %v409, %v425
  %v474 = vadd.f32 %v410, %v426
  %v475 = vadd.f32 %v411, %v427
  %v476 = vadd.f32 %v412, %v428
  %v477 = vadd.f32 %v413, %v429
  %v478 = vadd.f32 %v414, %v430
  %v479 = vadd.f32 %v415, %v431
  %v480 = vadd.f32 %v416, %v432
  %v481 = vadd.f32 %v433, %v449
  %v482 = vadd.f32 %v434, %v450
  %v483 = vadd.f32 %v435, %v451
  %v484 = vadd.f32 %v436, %v452
  %v485 = vadd.f32 %v437, %v453
  %v486 = vadd.f32 %v438, %v454
  %v487 = vadd.f32 %v439, %v455
  %v488 = vadd.f32 %v440, %v456
  %v489 = vadd.f32 %v441, %v457
  %v490 = vadd.f32 %v442, %v458
  %v491 = vadd.f32 %v443, %v459
  %v492 = vadd.f32 %v444, %v460
  %v493 = vadd.f32 %v445, %v461
  %v494 = vadd.f32 %v446, %v462
  %v495 = vadd.f32 %v447, %v463
  %v496 = vadd.f32 %v448, %v464
  %v497 = vadd.f32 %v465, %v481
  %v498 = vadd.f32 %v466, %v482
  %v499 = vadd.f32 %v467, %v483
  %v500 = vadd.f32 %v468, %v484
  %v501 = vadd.f32 %v469, %v485
  %v502 = vadd.f32 %v470, %v486
  %v503 = vadd.f32 %v471, %v487
  %v504 = vadd.f32 %v472, %v488
  %v505 = vadd.f32 %v473, %v489
  %v506 = vadd.f32 %v474, %v490
  %v507 = vadd.f32 %v475, %v491
  %v508 = vadd.f32 %v476, %v492
  %v509 = vadd.f32 %v477, %v493
  %v510 = vadd.f32 %v478, %v494
  %v511 = vadd.f32 %v479, %v495
  %v512 = vadd.f32 %v480, %v496
  %v513 = vadd.f32 %v497, %v385
  %v514 = vadd.f32 %v498, %v386
  %v515 = vadd.f32 %v499, %v387
  %v516 = vadd.f32 %v500, %v388
  %v517 = vadd.f32 %v501, %v389
  %v518 = vadd.f32 %v502, %v390
  %v519 = vadd.f32 %v503, %v391
  %v520 = vadd.f32 %v504, %v392
  %v521 = vadd.f32 %v505, %v393
  %v522 = vadd.f32 %v506, %v394
  %v523 = vadd.f32 %v507, %v395
  %v524 = vadd.f32 %v508, %v396
  %v525 = vadd.f32 %v509, %v397
  %v526 = vadd.f32 %v510, %v398
  %v527 = vadd.f32 %v511, %v399
  %v528 = vadd.f32 %v512, %v400
  %v529 = vld [vmem:[%s2] sm:$0x1]
  %v531 = vlaneseq
  %v532 = vshrl.u32 %v531, 7
  %v533 = vsub.s32 0, %v532
  %v534 = vrot.slane %v529, %v533
  %v536 = vmul.f32 %v513, %v534
  %v537 = vmul.f32 %v514, %v534
  %v538 = vmul.f32 %v515, %v534
  %v539 = vmul.f32 %v516, %v534
  %v540 = vmul.f32 %v517, %v534
  %v541 = vmul.f32 %v518, %v534
  %v542 = vmul.f32 %v519, %v534
  %v543 = vmul.f32 %v520, %v534
  %v544 = vmul.f32 %v521, %v534
  %v545 = vmul.f32 %v522, %v534
  %v546 = vmul.f32 %v523, %v534
  %v547 = vmul.f32 %v524, %v534
  %v548 = vmul.f32 %v525, %v534
  %v549 = vmul.f32 %v526, %v534
  %v550 = vmul.f32 %v527, %v534
  %v551 = vmul.f32 %v528, %v534
  %v552 = vld [vmem:[%s3] sm:$0x1]
  %v554 = vlaneseq
  %v555 = vshrl.u32 %v554, 7
  %v556 = vsub.s32 0, %v555
  %v557 = vrot.slane %v552, %v556
  %v559 = vadd.f32 %v536, %v557
  %v560 = vadd.f32 %v537, %v557
  %v561 = vadd.f32 %v538, %v557
  %v562 = vadd.f32 %v539, %v557
  %v563 = vadd.f32 %v540, %v557
  %v564 = vadd.f32 %v541, %v557
  %v565 = vadd.f32 %v542, %v557
  %v566 = vadd.f32 %v543, %v557
  %v567 = vadd.f32 %v544, %v557
  %v568 = vadd.f32 %v545, %v557
  %v569 = vadd.f32 %v546, %v557
  %v570 = vadd.f32 %v547, %v557
  %v571 = vadd.f32 %v548, %v557
  %v572 = vadd.f32 %v549, %v557
  %v573 = vadd.f32 %v550, %v557
  %v574 = vadd.f32 %v551, %v557
  %v575 = vmax.f32 %v559, 0.0
  %v576 = vmax.f32 %v560, 0.0
  %v577 = vmax.f32 %v561, 0.0
  %v578 = vmax.f32 %v562, 0.0
  %v579 = vmax.f32 %v563, 0.0
  %v580 = vmax.f32 %v564, 0.0
  %v581 = vmax.f32 %v565, 0.0
  %v582 = vmax.f32 %v566, 0.0
  %v583 = vmax.f32 %v567, 0.0
  %v584 = vmax.f32 %v568, 0.0
  %v585 = vmax.f32 %v569, 0.0
  %v586 = vmax.f32 %v570, 0.0
  %v587 = vmax.f32 %v571, 0.0
  %v588 = vmax.f32 %v572, 0.0
  %v589 = vmax.f32 %v573, 0.0
  %v590 = vmax.f32 %v574, 0.0
  %v591 = vmin.f32 %v575, 6.0
  %v592 = vmin.f32 %v576, 6.0
  %v593 = vmin.f32 %v577, 6.0
  %v594 = vmin.f32 %v578, 6.0
  %v595 = vmin.f32 %v579, 6.0
  %v596 = vmin.f32 %v580, 6.0
  %v597 = vmin.f32 %v581, 6.0
  %v598 = vmin.f32 %v582, 6.0
  %v599 = vmin.f32 %v583, 6.0
  %v600 = vmin.f32 %v584, 6.0
  %v601 = vmin.f32 %v585, 6.0
  %v602 = vmin.f32 %v586, 6.0
  %v603 = vmin.f32 %v587, 6.0
  %v604 = vmin.f32 %v588, 6.0
  %v605 = vmin.f32 %v589, 6.0
  %v606 = vmin.f32 %v590, 6.0
  %v607 = vpack.c.bf16 %v592, %v591
  %v608 = vpack.c.bf16 %v594, %v593
  %v609 = vpack.c.bf16 %v596, %v595
  %v610 = vpack.c.bf16 %v598, %v597
  %v611 = vpack.c.bf16 %v600, %v599
  %v612 = vpack.c.bf16 %v602, %v601
  %v613 = vpack.c.bf16 %v604, %v603
  %v614 = vpack.c.bf16 %v606, %v605
  %v615 = vld [vmem:[%s4] sm:$0x3]
  %vm616 = vcmask 31744
  %v618 = vsel %vm616, %v607, 0
  %v621 = vsel %vm616, %v608, 0
  %v624 = vsel %vm616, %v609, 0
  %v627 = vsel %vm616, %v610, 0
  %v630 = vsel %vm616, %v611, 0
  %v633 = vsel %vm616, %v612, 0
  %v636 = vsel %vm616, %v613, 0
  %v639 = vsel %vm616, %v614, 0
  %vm641 = vcmask 1041408
  %v643 = vsel %vm641, %v615, 0
  %645 = vmatprep.subr.bf16.mxu0 0
  %646 = vmatpush1.bf16.msra.mxu0 0
  %647 = vmatprep.subr.bf16.mxu0 0
  %648 = vmatpush1.bf16.msra.mxu0 0
  %649 = vmatprep.subr.bf16.mxu0 0
  %650 = vmatpush1.bf16.msra.mxu0 0
  %651 = vmatprep.subr.bf16.mxu0 0
  %652 = vmatpush1.bf16.msra.mxu0 0
  %653 = vmatprep.subr.bf16.mxu0 0
  %654 = vmatpush1.bf16.msra.mxu0 0
  %655 = vmatprep.subr.bf16.mxu0 0
  %656 = vmatpush1.bf16.msra.mxu0 0
  %657 = vmatprep.subr.bf16.mxu0 0
  %658 = vmatpush1.bf16.msra.mxu0 0
  %659 = vmatprep.subr.bf16.mxu0 0
  %660 = vmatpush1.bf16.msra.mxu0 %v643
  %661 = vmatprep.subr.bf16.mxu0 0
  %662 = vmatpush2.bf16.msra.mxu0 0
  %663 = vmatprep.subr.bf16.mxu0 0
  %664 = vmatpush2.bf16.msra.mxu0 0
  %665 = vmatprep.subr.bf16.mxu0 0
  %666 = vmatpush2.bf16.msra.mxu0 0
  %667 = vmatprep.subr.bf16.mxu0 0
  %668 = vmatpush2.bf16.msra.mxu0 0
  %669 = vmatprep.subr.bf16.mxu0 0
  %670 = vmatpush2.bf16.msra.mxu0 0
  %671 = vmatprep.subr.bf16.mxu0 0
  %672 = vmatpush2.bf16.msra.mxu0 0
  %673 = vmatprep.subr.bf16.mxu0 0
  %674 = vmatpush2.bf16.msra.mxu0 0
  %675 = vmatprep.subr.bf16.mxu0 0
  %676 = vmatpush2.bf16.msra.mxu0 0
  %677 = vmatprep.mubr.bf16.mxu0 0
  %678 = vmatmul.mubr.bf16.gmra.mxu0 %v618
  %v679 = vpop.f32.mrf.mxu0
  %v680 = vadd.f32 0.0, %v679
  %v681 = vpop.f32.mrf.mxu0
  %v682 = vpop.f32.mrf.mxu0
  %v683 = vadd.f32 0.0, %v682
  %v684 = vpop.f32.mrf.mxu0
  %685 = vmatprep.mubr.bf16.mxu0 0
  %686 = vmatmul.mubr.bf16.gmra.mxu0 %v621
  %v687 = vpop.f32.mrf.mxu0
  %v688 = vadd.f32 0.0, %v687
  %v689 = vpop.f32.mrf.mxu0
  %v690 = vpop.f32.mrf.mxu0
  %v691 = vadd.f32 0.0, %v690
  %v692 = vpop.f32.mrf.mxu0
  %693 = vmatprep.mubr.bf16.mxu0 0
  %694 = vmatmul.mubr.bf16.gmra.mxu0 %v624
  %v695 = vpop.f32.mrf.mxu0
  %v696 = vadd.f32 0.0, %v695
  %v697 = vpop.f32.mrf.mxu0
  %v698 = vpop.f32.mrf.mxu0
  %v699 = vadd.f32 0.0, %v698
  %v700 = vpop.f32.mrf.mxu0
  %701 = vmatprep.mubr.bf16.mxu0 0
  %702 = vmatmul.mubr.bf16.gmra.mxu0 %v627
  %v703 = vpop.f32.mrf.mxu0
  %v704 = vadd.f32 0.0, %v703
  %v705 = vpop.f32.mrf.mxu0
  %v706 = vpop.f32.mrf.mxu0
  %v707 = vadd.f32 0.0, %v706
  %v708 = vpop.f32.mrf.mxu0
  %709 = vmatprep.mubr.bf16.mxu0 0
  %710 = vmatmul.mubr.bf16.gmra.mxu0 %v630
  %v711 = vpop.f32.mrf.mxu0
  %v712 = vadd.f32 0.0, %v711
  %v713 = vpop.f32.mrf.mxu0
  %v714 = vpop.f32.mrf.mxu0
  %v715 = vadd.f32 0.0, %v714
  %v716 = vpop.f32.mrf.mxu0
  %717 = vmatprep.mubr.bf16.mxu0 0
  %718 = vmatmul.mubr.bf16.gmra.mxu0 %v633
  %v719 = vpop.f32.mrf.mxu0
  %v720 = vadd.f32 0.0, %v719
  %v721 = vpop.f32.mrf.mxu0
  %v722 = vpop.f32.mrf.mxu0
  %v723 = vadd.f32 0.0, %v722
  %v724 = vpop.f32.mrf.mxu0
  %725 = vmatprep.mubr.bf16.mxu0 0
  %726 = vmatmul.mubr.bf16.gmra.mxu0 %v636
  %v727 = vpop.f32.mrf.mxu0
  %v728 = vadd.f32 0.0, %v727
  %v729 = vpop.f32.mrf.mxu0
  %v730 = vpop.f32.mrf.mxu0
  %v731 = vadd.f32 0.0, %v730
  %v732 = vpop.f32.mrf.mxu0
  %733 = vmatprep.mubr.bf16.mxu0 0
  %734 = vmatmul.mubr.bf16.gmra.mxu0 %v639
  %v735 = vpop.f32.mrf.mxu0
  %v736 = vadd.f32 0.0, %v735
  %v737 = vpop.f32.mrf.mxu0
  %v738 = vpop.f32.mrf.mxu0
  %v739 = vadd.f32 0.0, %v738
  %v740 = vpop.f32.mrf.mxu0
  %741 = vdwg.mxu0
  %v742 = vld [vmem:[%s5] sm:$0x1]
  %v744 = vlaneseq
  %v745 = vshrl.u32 %v744, 7
  %v746 = vsub.s32 0, %v745
  %v747 = vrot.slane %v742, %v746
  %v749 = vmul.f32 %v680, %v747
  %v750 = vmul.f32 %v683, %v747
  %v751 = vmul.f32 %v688, %v747
  %v752 = vmul.f32 %v691, %v747
  %v753 = vmul.f32 %v696, %v747
  %v754 = vmul.f32 %v699, %v747
  %v755 = vmul.f32 %v704, %v747
  %v756 = vmul.f32 %v707, %v747
  %v757 = vmul.f32 %v712, %v747
  %v758 = vmul.f32 %v715, %v747
  %v759 = vmul.f32 %v720, %v747
  %v760 = vmul.f32 %v723, %v747
  %v761 = vmul.f32 %v728, %v747
  %v762 = vmul.f32 %v731, %v747
  %v763 = vmul.f32 %v736, %v747
  %v764 = vmul.f32 %v739, %v747
  %v765 = vld [vmem:[%s6] sm:$0x1]
  %v767 = vlaneseq
  %v768 = vshrl.u32 %v767, 7
  %v769 = vsub.s32 0, %v768
  %v770 = vrot.slane %v765, %v769
  %v772 = vadd.f32 %v749, %v770
  %v773 = vadd.f32 %v750, %v770
  %v774 = vadd.f32 %v751, %v770
  %v775 = vadd.f32 %v752, %v770
  %v776 = vadd.f32 %v753, %v770
  %v777 = vadd.f32 %v754, %v770
  %v778 = vadd.f32 %v755, %v770
  %v779 = vadd.f32 %v756, %v770
  %v780 = vadd.f32 %v757, %v770
  %v781 = vadd.f32 %v758, %v770
  %v782 = vadd.f32 %v759, %v770
  %v783 = vadd.f32 %v760, %v770
  %v784 = vadd.f32 %v761, %v770
  %v785 = vadd.f32 %v762, %v770
  %v786 = vadd.f32 %v763, %v770
  %v787 = vadd.f32 %v764, %v770
  %v788 = vmax.f32 %v772, 0.0
  %v789 = vmax.f32 %v773, 0.0
  %v790 = vmax.f32 %v774, 0.0
  %v791 = vmax.f32 %v775, 0.0
  %v792 = vmax.f32 %v776, 0.0
  %v793 = vmax.f32 %v777, 0.0
  %v794 = vmax.f32 %v778, 0.0
  %v795 = vmax.f32 %v779, 0.0
  %v796 = vmax.f32 %v780, 0.0
  %v797 = vmax.f32 %v781, 0.0
  %v798 = vmax.f32 %v782, 0.0
  %v799 = vmax.f32 %v783, 0.0
  %v800 = vmax.f32 %v784, 0.0
  %v801 = vmax.f32 %v785, 0.0
  %v802 = vmax.f32 %v786, 0.0
  %v803 = vmax.f32 %v787, 0.0
  %v804 = vmin.f32 %v788, 6.0
  %v805 = vmin.f32 %v789, 6.0
  %v806 = vmin.f32 %v790, 6.0
  %v807 = vmin.f32 %v791, 6.0
  %v808 = vmin.f32 %v792, 6.0
  %v809 = vmin.f32 %v793, 6.0
  %v810 = vmin.f32 %v794, 6.0
  %v811 = vmin.f32 %v795, 6.0
  %v812 = vmin.f32 %v796, 6.0
  %v813 = vmin.f32 %v797, 6.0
  %v814 = vmin.f32 %v798, 6.0
  %v815 = vmin.f32 %v799, 6.0
  %v816 = vmin.f32 %v800, 6.0
  %v817 = vmin.f32 %v801, 6.0
  %v818 = vmin.f32 %v802, 6.0
  %v819 = vmin.f32 %v803, 6.0
  %vm820 = vcmask 64512
  %821 = vst.msk [vmem:[#allocation2] sm:$0xff] %vm820, 0.0
  %822 = vst.msk [vmem:[#allocation2 + $0x8] sm:$0xff] %vm820, 0.0
  %823 = vst.msk [vmem:[#allocation2 + $0x10] sm:$0xff] %vm820, 0.0
  %824 = vst.msk [vmem:[#allocation2 + $0xf0] sm:$0xff] %vm820, 0.0
  %825 = vst.msk [vmem:[#allocation2 + $0xf8] sm:$0xff] %vm820, 0.0
  %826 = vst.msk [vmem:[#allocation2 + $0x100] sm:$0xff] %vm820, 0.0
  %s827 = scalar_lea.vmem [#allocation2], 216
  %828 = vst.msk [vmem:[%s827] sm:$0xff] %vm820, 0.0
  %829 = vst.msk [vmem:[%s827 + $0x8] sm:$0xff] %vm820, 0.0
  %830 = vst.msk [vmem:[%s827 + $0x10] sm:$0xff] %vm820, 0.0
  %831 = vst.msk [vmem:[%s827 + $0xf0] sm:$0xff] %vm820, 0.0
  %832 = vst.msk [vmem:[%s827 + $0xf8] sm:$0xff] %vm820, 0.0
  %833 = vst.msk [vmem:[%s827 + $0x100] sm:$0xff] %vm820, 0.0
  %834 = vst.msk [vmem:[#allocation2] sm:$0xff] %vm820, 0.0
  %835 = vst.msk [vmem:[#allocation2 + $0x18] sm:$0xff] %vm820, 0.0
  %836 = vst.msk [vmem:[#allocation2 + $0x30] sm:$0xff] %vm820, 0.0
  %837 = vst.msk [vmem:[#allocation2 + $0x48] sm:$0xff] %vm820, 0.0
  %838 = vst.msk [vmem:[#allocation2 + $0x60] sm:$0xff] %vm820, 0.0
  %839 = vst.msk [vmem:[#allocation2 + $0x78] sm:$0xff] %vm820, 0.0
  %840 = vst.msk [vmem:[#allocation2 + $0x90] sm:$0xff] %vm820, 0.0
  %841 = vst.msk [vmem:[#allocation2 + $0xa8] sm:$0xff] %vm820, 0.0
  %842 = vst.msk [vmem:[#allocation2 + $0xc0] sm:$0xff] %vm820, 0.0
  %843 = vst.msk [vmem:[#allocation2 + $0xd8] sm:$0xff] %vm820, 0.0
  %844 = vst.msk [vmem:[#allocation2 + $0xf0] sm:$0xff] %vm820, 0.0
  %845 = vst.msk [vmem:[#allocation2 + $0x108] sm:$0xff] %vm820, 0.0
  %846 = vst.msk [vmem:[#allocation2 + $0x120] sm:$0xff] %vm820, 0.0
  %847 = vst.msk [vmem:[#allocation2 + $0x138] sm:$0xff] %vm820, 0.0
  %848 = vst.msk [vmem:[#allocation2 + $0x150] sm:$0xff] %vm820, 0.0
  %849 = vst.msk [vmem:[#allocation2 + $0x168] sm:$0xff] %vm820, 0.0
  %850 = vst.msk [vmem:[#allocation2 + $0x180] sm:$0xff] %vm820, 0.0
  %851 = vst.msk [vmem:[#allocation2 + $0x198] sm:$0xff] %vm820, 0.0
  %852 = vst.msk [vmem:[#allocation2 + $0x1b0] sm:$0xff] %vm820, 0.0
  %853 = vst.msk [vmem:[#allocation2 + $0x1c8] sm:$0xff] %vm820, 0.0
  %854 = vst.msk [vmem:[#allocation2 + $0x10] sm:$0xff] %vm820, 0.0
  %855 = vst.msk [vmem:[#allocation2 + $0x28] sm:$0xff] %vm820, 0.0
  %856 = vst.msk [vmem:[#allocation2 + $0x40] sm:$0xff] %vm820, 0.0
  %857 = vst.msk [vmem:[#allocation2 + $0x58] sm:$0xff] %vm820, 0.0
  %858 = vst.msk [vmem:[#allocation2 + $0x70] sm:$0xff] %vm820, 0.0
  %859 = vst.msk [vmem:[#allocation2 + $0x88] sm:$0xff] %vm820, 0.0
  %860 = vst.msk [vmem:[#allocation2 + $0xa0] sm:$0xff] %vm820, 0.0
  %861 = vst.msk [vmem:[#allocation2 + $0xb8] sm:$0xff] %vm820, 0.0
  %862 = vst.msk [vmem:[#allocation2 + $0xd0] sm:$0xff] %vm820, 0.0
  %863 = vst.msk [vmem:[#allocation2 + $0xe8] sm:$0xff] %vm820, 0.0
  %864 = vst.msk [vmem:[#allocation2 + $0x100] sm:$0xff] %vm820, 0.0
  %865 = vst.msk [vmem:[#allocation2 + $0x118] sm:$0xff] %vm820, 0.0
  %866 = vst.msk [vmem:[#allocation2 + $0x130] sm:$0xff] %vm820, 0.0
  %867 = vst.msk [vmem:[#allocation2 + $0x148] sm:$0xff] %vm820, 0.0
  %868 = vst.msk [vmem:[#allocation2 + $0x160] sm:$0xff] %vm820, 0.0
  %869 = vst.msk [vmem:[#allocation2 + $0x178] sm:$0xff] %vm820, 0.0
  %870 = vst.msk [vmem:[#allocation2 + $0x190] sm:$0xff] %vm820, 0.0
  %871 = vst.msk [vmem:[#allocation2 + $0x1a8] sm:$0xff] %vm820, 0.0
  %872 = vst.msk [vmem:[#allocation2 + $0x1c0] sm:$0xff] %vm820, 0.0
  %873 = vst.msk [vmem:[#allocation2 + $0x1d8] sm:$0xff] %vm820, 0.0
  %s874 = scalar_lea.vmem [#allocation2], 24
  %875 = vst.msk [vmem:[%s874 + $0x8] sm:$0xff] %vm820, %v804
  %876 = vst.msk [vmem:[%s874 + $0x20] sm:$0xff] %vm820, %v805
  %877 = vst.msk [vmem:[%s874 + $0x38] sm:$0xff] %vm820, %v806
  %878 = vst.msk [vmem:[%s874 + $0x50] sm:$0xff] %vm820, %v807
  %879 = vst.msk [vmem:[%s874 + $0x68] sm:$0xff] %vm820, %v808
  %880 = vst.msk [vmem:[%s874 + $0x80] sm:$0xff] %vm820, %v809
  %881 = vst.msk [vmem:[%s874 + $0x98] sm:$0xff] %vm820, %v810
  %882 = vst.msk [vmem:[%s874 + $0xb0] sm:$0xff] %vm820, %v811
  %883 = vst.msk [vmem:[%s874 + $0xf8] sm:$0xff] %vm820, %v812
  %884 = vst.msk [vmem:[%s874 + $0x110] sm:$0xff] %vm820, %v813
  %885 = vst.msk [vmem:[%s874 + $0x128] sm:$0xff] %vm820, %v814
  %886 = vst.msk [vmem:[%s874 + $0x140] sm:$0xff] %vm820, %v815
  %887 = vst.msk [vmem:[%s874 + $0x158] sm:$0xff] %vm820, %v816
  %888 = vst.msk [vmem:[%s874 + $0x170] sm:$0xff] %vm820, %v817
  %889 = vst.msk [vmem:[%s874 + $0x188] sm:$0xff] %vm820, %v818
  %890 = vst.msk [vmem:[%s874 + $0x1a0] sm:$0xff] %vm820, %v819
  %v891 = vld [vmem:[%s7] sm:$0x1]
  %v892 = vld [vmem:[%s7 + $0x1] sm:$0x1]
  %v893 = vld [vmem:[%s7 + $0x2] sm:$0x1]
  %v894 = vld [vmem:[%s7 + $0x3] sm:$0x1]
  %v895 = vld [vmem:[%s7 + $0x4] sm:$0x1]
  %v896 = vld [vmem:[%s7 + $0x5] sm:$0x1]
  %v897 = vld [vmem:[%s7 + $0x6] sm:$0x1]
  %v898 = vld [vmem:[%s7 + $0x7] sm:$0x1]
  %v899 = vld [vmem:[%s7 + $0x8] sm:$0x1]
  %v900 = vld [vmem:[#allocation2 + $0x7] sm:$0xff]
  %v901 = vld [vmem:[#allocation2 + $0x1f] sm:$0xff]
  %v902 = vld [vmem:[#allocation2 + $0x37] sm:$0xff]
  %v903 = vld [vmem:[#allocation2 + $0x4f] sm:$0xff]
  %v904 = vld [vmem:[#allocation2 + $0x67] sm:$0xff]
  %v905 = vld [vmem:[#allocation2 + $0x7f] sm:$0xff]
  %v906 = vld [vmem:[#allocation2 + $0x97] sm:$0xff]
  %v907 = vld [vmem:[#allocation2 + $0xaf] sm:$0xff]
  %v908 = vld [vmem:[#allocation2 + $0xf7] sm:$0xff]
  %v909 = vld [vmem:[#allocation2 + $0x10f] sm:$0xff]
  %v910 = vld [vmem:[#allocation2 + $0x127] sm:$0xff]
  %v911 = vld [vmem:[#allocation2 + $0x13f] sm:$0xff]
  %v912 = vld [vmem:[#allocation2 + $0x157] sm:$0xff]
  %v913 = vld [vmem:[#allocation2 + $0x16f] sm:$0xff]
  %v914 = vld [vmem:[#allocation2 + $0x187] sm:$0xff]
  %v915 = vld [vmem:[#allocation2 + $0x19f] sm:$0xff]
  %v917 = vlaneseq
  %v918 = vshrl.u32 %v917, 7
  %v919 = vsub.s32 0, %v918
  %v920 = vrot.slane %v891, %v919
  %v922 = vmul.f32 %v900, %v920
  %v923 = vmul.f32 %v901, %v920
  %v924 = vmul.f32 %v902, %v920
  %v925 = vmul.f32 %v903, %v920
  %v926 = vmul.f32 %v904, %v920
  %v927 = vmul.f32 %v905, %v920
  %v928 = vmul.f32 %v906, %v920
  %v929 = vmul.f32 %v907, %v920
  %v930 = vmul.f32 %v908, %v920
  %v931 = vmul.f32 %v909, %v920
  %v932 = vmul.f32 %v910, %v920
  %v933 = vmul.f32 %v911, %v920
  %v934 = vmul.f32 %v912, %v920
  %v935 = vmul.f32 %v913, %v920
  %v936 = vmul.f32 %v914, %v920
  %v937 = vmul.f32 %v915, %v920
  %v938 = vld [vmem:[#allocation2 + $0x8] sm:$0xff]
  %v939 = vld [vmem:[#allocation2 + $0x20] sm:$0xff]
  %v940 = vld [vmem:[#allocation2 + $0x38] sm:$0xff]
  %v941 = vld [vmem:[#allocation2 + $0x50] sm:$0xff]
  %v942 = vld [vmem:[#allocation2 + $0x68] sm:$0xff]
  %v943 = vld [vmem:[#allocation2 + $0x80] sm:$0xff]
  %v944 = vld [vmem:[#allocation2 + $0x98] sm:$0xff]
  %v945 = vld [vmem:[#allocation2 + $0xb0] sm:$0xff]
  %v946 = vld [vmem:[#allocation2 + $0xf8] sm:$0xff]
  %v947 = vld [vmem:[#allocation2 + $0x110] sm:$0xff]
  %v948 = vld [vmem:[#allocation2 + $0x128] sm:$0xff]
  %v949 = vld [vmem:[#allocation2 + $0x140] sm:$0xff]
  %v950 = vld [vmem:[#allocation2 + $0x158] sm:$0xff]
  %v951 = vld [vmem:[#allocation2 + $0x170] sm:$0xff]
  %v952 = vld [vmem:[#allocation2 + $0x188] sm:$0xff]
  %v953 = vld [vmem:[#allocation2 + $0x1a0] sm:$0xff]
  %v955 = vlaneseq
  %v956 = vshrl.u32 %v955, 7
  %v957 = vsub.s32 0, %v956
  %v958 = vrot.slane %v892, %v957
  %v960 = vmul.f32 %v938, %v958
  %v961 = vmul.f32 %v939, %v958
  %v962 = vmul.f32 %v940, %v958
  %v963 = vmul.f32 %v941, %v958
  %v964 = vmul.f32 %v942, %v958
  %v965 = vmul.f32 %v943, %v958
  %v966 = vmul.f32 %v944, %v958
  %v967 = vmul.f32 %v945, %v958
  %v968 = vmul.f32 %v946, %v958
  %v969 = vmul.f32 %v947, %v958
  %v970 = vmul.f32 %v948, %v958
  %v971 = vmul.f32 %v949, %v958
  %v972 = vmul.f32 %v950, %v958
  %v973 = vmul.f32 %v951, %v958
  %v974 = vmul.f32 %v952, %v958
  %v975 = vmul.f32 %v953, %v958
  %v976 = vld [vmem:[#allocation2 + $0x9] sm:$0xff]
  %v977 = vld [vmem:[#allocation2 + $0x21] sm:$0xff]
  %v978 = vld [vmem:[#allocation2 + $0x39] sm:$0xff]
  %v979 = vld [vmem:[#allocation2 + $0x51] sm:$0xff]
  %v980 = vld [vmem:[#allocation2 + $0x69] sm:$0xff]
  %v981 = vld [vmem:[#allocation2 + $0x81] sm:$0xff]
  %v982 = vld [vmem:[#allocation2 + $0x99] sm:$0xff]
  %v983 = vld [vmem:[#allocation2 + $0xb1] sm:$0xff]
  %v984 = vld [vmem:[#allocation2 + $0xf9] sm:$0xff]
  %v985 = vld [vmem:[#allocation2 + $0x111] sm:$0xff]
  %v986 = vld [vmem:[#allocation2 + $0x129] sm:$0xff]
  %v987 = vld [vmem:[#allocation2 + $0x141] sm:$0xff]
  %v988 = vld [vmem:[#allocation2 + $0x159] sm:$0xff]
  %v989 = vld [vmem:[#allocation2 + $0x171] sm:$0xff]
  %v990 = vld [vmem:[#allocation2 + $0x189] sm:$0xff]
  %v991 = vld [vmem:[#allocation2 + $0x1a1] sm:$0xff]
  %v993 = vlaneseq
  %v994 = vshrl.u32 %v993, 7
  %v995 = vsub.s32 0, %v994
  %v996 = vrot.slane %v893, %v995
  %v998 = vmul.f32 %v976, %v996
  %v999 = vmul.f32 %v977, %v996
  %v1000 = vmul.f32 %v978, %v996
  %v1001 = vmul.f32 %v979, %v996
  %v1002 = vmul.f32 %v980, %v996
  %v1003 = vmul.f32 %v981, %v996
  %v1004 = vmul.f32 %v982, %v996
  %v1005 = vmul.f32 %v983, %v996
  %v1006 = vmul.f32 %v984, %v996
  %v1007 = vmul.f32 %v985, %v996
  %v1008 = vmul.f32 %v986, %v996
  %v1009 = vmul.f32 %v987, %v996
  %v1010 = vmul.f32 %v988, %v996
  %v1011 = vmul.f32 %v989, %v996
  %v1012 = vmul.f32 %v990, %v996
  %v1013 = vmul.f32 %v991, %v996
  %v1014 = vld [vmem:[%s874 + $0x7] sm:$0xff]
  %v1015 = vld [vmem:[%s874 + $0x1f] sm:$0xff]
  %v1016 = vld [vmem:[%s874 + $0x37] sm:$0xff]
  %v1017 = vld [vmem:[%s874 + $0x4f] sm:$0xff]
  %v1018 = vld [vmem:[%s874 + $0x67] sm:$0xff]
  %v1019 = vld [vmem:[%s874 + $0x7f] sm:$0xff]
  %v1020 = vld [vmem:[%s874 + $0x97] sm:$0xff]
  %v1021 = vld [vmem:[%s874 + $0xaf] sm:$0xff]
  %v1022 = vld [vmem:[%s874 + $0xf7] sm:$0xff]
  %v1023 = vld [vmem:[%s874 + $0x10f] sm:$0xff]
  %v1024 = vld [vmem:[%s874 + $0x127] sm:$0xff]
  %v1025 = vld [vmem:[%s874 + $0x13f] sm:$0xff]
  %v1026 = vld [vmem:[%s874 + $0x157] sm:$0xff]
  %v1027 = vld [vmem:[%s874 + $0x16f] sm:$0xff]
  %v1028 = vld [vmem:[%s874 + $0x187] sm:$0xff]
  %v1029 = vld [vmem:[%s874 + $0x19f] sm:$0xff]
  %v1031 = vlaneseq
  %v1032 = vshrl.u32 %v1031, 7
  %v1033 = vsub.s32 0, %v1032
  %v1034 = vrot.slane %v894, %v1033
  %v1036 = vmul.f32 %v1014, %v1034
  %v1037 = vmul.f32 %v1015, %v1034
  %v1038 = vmul.f32 %v1016, %v1034
  %v1039 = vmul.f32 %v1017, %v1034
  %v1040 = vmul.f32 %v1018, %v1034
  %v1041 = vmul.f32 %v1019, %v1034
  %v1042 = vmul.f32 %v1020, %v1034
  %v1043 = vmul.f32 %v1021, %v1034
  %v1044 = vmul.f32 %v1022, %v1034
  %v1045 = vmul.f32 %v1023, %v1034
  %v1046 = vmul.f32 %v1024, %v1034
  %v1047 = vmul.f32 %v1025, %v1034
  %v1048 = vmul.f32 %v1026, %v1034
  %v1049 = vmul.f32 %v1027, %v1034
  %v1050 = vmul.f32 %v1028, %v1034
  %v1051 = vmul.f32 %v1029, %v1034
  %v1052 = vld [vmem:[%s874 + $0x8] sm:$0xff]
  %v1053 = vld [vmem:[%s874 + $0x20] sm:$0xff]
  %v1054 = vld [vmem:[%s874 + $0x38] sm:$0xff]
  %v1055 = vld [vmem:[%s874 + $0x50] sm:$0xff]
  %v1056 = vld [vmem:[%s874 + $0x68] sm:$0xff]
  %v1057 = vld [vmem:[%s874 + $0x80] sm:$0xff]
  %v1058 = vld [vmem:[%s874 + $0x98] sm:$0xff]
  %v1059 = vld [vmem:[%s874 + $0xb0] sm:$0xff]
  %v1060 = vld [vmem:[%s874 + $0xf8] sm:$0xff]
  %v1061 = vld [vmem:[%s874 + $0x110] sm:$0xff]
  %v1062 = vld [vmem:[%s874 + $0x128] sm:$0xff]
  %v1063 = vld [vmem:[%s874 + $0x140] sm:$0xff]
  %v1064 = vld [vmem:[%s874 + $0x158] sm:$0xff]
  %v1065 = vld [vmem:[%s874 + $0x170] sm:$0xff]
  %v1066 = vld [vmem:[%s874 + $0x188] sm:$0xff]
  %v1067 = vld [vmem:[%s874 + $0x1a0] sm:$0xff]
  %v1069 = vlaneseq
  %v1070 = vshrl.u32 %v1069, 7
  %v1071 = vsub.s32 0, %v1070
  %v1072 = vrot.slane %v895, %v1071
  %v1074 = vmul.f32 %v1052, %v1072
  %v1075 = vmul.f32 %v1053, %v1072
  %v1076 = vmul.f32 %v1054, %v1072
  %v1077 = vmul.f32 %v1055, %v1072
  %v1078 = vmul.f32 %v1056, %v1072
  %v1079 = vmul.f32 %v1057, %v1072
  %v1080 = vmul.f32 %v1058, %v1072
  %v1081 = vmul.f32 %v1059, %v1072
  %v1082 = vmul.f32 %v1060, %v1072
  %v1083 = vmul.f32 %v1061, %v1072
  %v1084 = vmul.f32 %v1062, %v1072
  %v1085 = vmul.f32 %v1063, %v1072
  %v1086 = vmul.f32 %v1064, %v1072
  %v1087 = vmul.f32 %v1065, %v1072
  %v1088 = vmul.f32 %v1066, %v1072
  %v1089 = vmul.f32 %v1067, %v1072
  %v1090 = vld [vmem:[%s874 + $0x9] sm:$0xff]
  %v1091 = vld [vmem:[%s874 + $0x21] sm:$0xff]
  %v1092 = vld [vmem:[%s874 + $0x39] sm:$0xff]
  %v1093 = vld [vmem:[%s874 + $0x51] sm:$0xff]
  %v1094 = vld [vmem:[%s874 + $0x69] sm:$0xff]
  %v1095 = vld [vmem:[%s874 + $0x81] sm:$0xff]
  %v1096 = vld [vmem:[%s874 + $0x99] sm:$0xff]
  %v1097 = vld [vmem:[%s874 + $0xb1] sm:$0xff]
  %v1098 = vld [vmem:[%s874 + $0xf9] sm:$0xff]
  %v1099 = vld [vmem:[%s874 + $0x111] sm:$0xff]
  %v1100 = vld [vmem:[%s874 + $0x129] sm:$0xff]
  %v1101 = vld [vmem:[%s874 + $0x141] sm:$0xff]
  %v1102 = vld [vmem:[%s874 + $0x159] sm:$0xff]
  %v1103 = vld [vmem:[%s874 + $0x171] sm:$0xff]
  %v1104 = vld [vmem:[%s874 + $0x189] sm:$0xff]
  %v1105 = vld [vmem:[%s874 + $0x1a1] sm:$0xff]
  %v1107 = vlaneseq
  %v1108 = vshrl.u32 %v1107, 7
  %v1109 = vsub.s32 0, %v1108
  %v1110 = vrot.slane %v896, %v1109
  %v1112 = vmul.f32 %v1090, %v1110
  %v1113 = vmul.f32 %v1091, %v1110
  %v1114 = vmul.f32 %v1092, %v1110
  %v1115 = vmul.f32 %v1093, %v1110
  %v1116 = vmul.f32 %v1094, %v1110
  %v1117 = vmul.f32 %v1095, %v1110
  %v1118 = vmul.f32 %v1096, %v1110
  %v1119 = vmul.f32 %v1097, %v1110
  %v1120 = vmul.f32 %v1098, %v1110
  %v1121 = vmul.f32 %v1099, %v1110
  %v1122 = vmul.f32 %v1100, %v1110
  %v1123 = vmul.f32 %v1101, %v1110
  %v1124 = vmul.f32 %v1102, %v1110
  %v1125 = vmul.f32 %v1103, %v1110
  %v1126 = vmul.f32 %v1104, %v1110
  %v1127 = vmul.f32 %v1105, %v1110
  %s1128 = scalar_lea.vmem [#allocation2], 48
  %v1129 = vld [vmem:[%s1128 + $0x7] sm:$0xff]
  %v1130 = vld [vmem:[%s1128 + $0x1f] sm:$0xff]
  %v1131 = vld [vmem:[%s1128 + $0x37] sm:$0xff]
  %v1132 = vld [vmem:[%s1128 + $0x4f] sm:$0xff]
  %v1133 = vld [vmem:[%s1128 + $0x67] sm:$0xff]
  %v1134 = vld [vmem:[%s1128 + $0x7f] sm:$0xff]
  %v1135 = vld [vmem:[%s1128 + $0x97] sm:$0xff]
  %v1136 = vld [vmem:[%s1128 + $0xaf] sm:$0xff]
  %v1137 = vld [vmem:[%s1128 + $0xf7] sm:$0xff]
  %v1138 = vld [vmem:[%s1128 + $0x10f] sm:$0xff]
  %v1139 = vld [vmem:[%s1128 + $0x127] sm:$0xff]
  %v1140 = vld [vmem:[%s1128 + $0x13f] sm:$0xff]
  %v1141 = vld [vmem:[%s1128 + $0x157] sm:$0xff]
  %v1142 = vld [vmem:[%s1128 + $0x16f] sm:$0xff]
  %v1143 = vld [vmem:[%s1128 + $0x187] sm:$0xff]
  %v1144 = vld [vmem:[%s1128 + $0x19f] sm:$0xff]
  %v1146 = vlaneseq
  %v1147 = vshrl.u32 %v1146, 7
  %v1148 = vsub.s32 0, %v1147
  %v1149 = vrot.slane %v897, %v1148
  %v1151 = vmul.f32 %v1129, %v1149
  %v1152 = vmul.f32 %v1130, %v1149
  %v1153 = vmul.f32 %v1131, %v1149
  %v1154 = vmul.f32 %v1132, %v1149
  %v1155 = vmul.f32 %v1133, %v1149
  %v1156 = vmul.f32 %v1134, %v1149
  %v1157 = vmul.f32 %v1135, %v1149
  %v1158 = vmul.f32 %v1136, %v1149
  %v1159 = vmul.f32 %v1137, %v1149
  %v1160 = vmul.f32 %v1138, %v1149
  %v1161 = vmul.f32 %v1139, %v1149
  %v1162 = vmul.f32 %v1140, %v1149
  %v1163 = vmul.f32 %v1141, %v1149
  %v1164 = vmul.f32 %v1142, %v1149
  %v1165 = vmul.f32 %v1143, %v1149
  %v1166 = vmul.f32 %v1144, %v1149
  %v1167 = vld [vmem:[%s1128 + $0x8] sm:$0xff]
  %v1168 = vld [vmem:[%s1128 + $0x20] sm:$0xff]
  %v1169 = vld [vmem:[%s1128 + $0x38] sm:$0xff]
  %v1170 = vld [vmem:[%s1128 + $0x50] sm:$0xff]
  %v1171 = vld [vmem:[%s1128 + $0x68] sm:$0xff]
  %v1172 = vld [vmem:[%s1128 + $0x80] sm:$0xff]
  %v1173 = vld [vmem:[%s1128 + $0x98] sm:$0xff]
  %v1174 = vld [vmem:[%s1128 + $0xb0] sm:$0xff]
  %v1175 = vld [vmem:[%s1128 + $0xf8] sm:$0xff]
  %v1176 = vld [vmem:[%s1128 + $0x110] sm:$0xff]
  %v1177 = vld [vmem:[%s1128 + $0x128] sm:$0xff]
  %v1178 = vld [vmem:[%s1128 + $0x140] sm:$0xff]
  %v1179 = vld [vmem:[%s1128 + $0x158] sm:$0xff]
  %v1180 = vld [vmem:[%s1128 + $0x170] sm:$0xff]
  %v1181 = vld [vmem:[%s1128 + $0x188] sm:$0xff]
  %v1182 = vld [vmem:[%s1128 + $0x1a0] sm:$0xff]
  %v1184 = vlaneseq
  %v1185 = vshrl.u32 %v1184, 7
  %v1186 = vsub.s32 0, %v1185
  %v1187 = vrot.slane %v898, %v1186
  %v1189 = vmul.f32 %v1167, %v1187
  %v1190 = vmul.f32 %v1168, %v1187
  %v1191 = vmul.f32 %v1169, %v1187
  %v1192 = vmul.f32 %v1170, %v1187
  %v1193 = vmul.f32 %v1171, %v1187
  %v1194 = vmul.f32 %v1172, %v1187
  %v1195 = vmul.f32 %v1173, %v1187
  %v1196 = vmul.f32 %v1174, %v1187
  %v1197 = vmul.f32 %v1175, %v1187
  %v1198 = vmul.f32 %v1176, %v1187
  %v1199 = vmul.f32 %v1177, %v1187
  %v1200 = vmul.f32 %v1178, %v1187
  %v1201 = vmul.f32 %v1179, %v1187
  %v1202 = vmul.f32 %v1180, %v1187
  %v1203 = vmul.f32 %v1181, %v1187
  %v1204 = vmul.f32 %v1182, %v1187
  %v1205 = vld [vmem:[%s1128 + $0x9] sm:$0xff]
  %v1206 = vld [vmem:[%s1128 + $0x21] sm:$0xff]
  %v1207 = vld [vmem:[%s1128 + $0x39] sm:$0xff]
  %v1208 = vld [vmem:[%s1128 + $0x51] sm:$0xff]
  %v1209 = vld [vmem:[%s1128 + $0x69] sm:$0xff]
  %v1210 = vld [vmem:[%s1128 + $0x81] sm:$0xff]
  %v1211 = vld [vmem:[%s1128 + $0x99] sm:$0xff]
  %v1212 = vld [vmem:[%s1128 + $0xb1] sm:$0xff]
  %v1213 = vld [vmem:[%s1128 + $0xf9] sm:$0xff]
  %v1214 = vld [vmem:[%s1128 + $0x111] sm:$0xff]
  %v1215 = vld [vmem:[%s1128 + $0x129] sm:$0xff]
  %v1216 = vld [vmem:[%s1128 + $0x141] sm:$0xff]
  %v1217 = vld [vmem:[%s1128 + $0x159] sm:$0xff]
  %v1218 = vld [vmem:[%s1128 + $0x171] sm:$0xff]
  %v1219 = vld [vmem:[%s1128 + $0x189] sm:$0xff]
  %v1220 = vld [vmem:[%s1128 + $0x1a1] sm:$0xff]
  %v1222 = vlaneseq
  %v1223 = vshrl.u32 %v1222, 7
  %v1224 = vsub.s32 0, %v1223
  %v1225 = vrot.slane %v899, %v1224
  %v1227 = vmul.f32 %v1205, %v1225
  %v1228 = vmul.f32 %v1206, %v1225
  %v1229 = vmul.f32 %v1207, %v1225
  %v1230 = vmul.f32 %v1208, %v1225
  %v1231 = vmul.f32 %v1209, %v1225
  %v1232 = vmul.f32 %v1210, %v1225
  %v1233 = vmul.f32 %v1211, %v1225
  %v1234 = vmul.f32 %v1212, %v1225
  %v1235 = vmul.f32 %v1213, %v1225
  %v1236 = vmul.f32 %v1214, %v1225
  %v1237 = vmul.f32 %v1215, %v1225
  %v1238 = vmul.f32 %v1216, %v1225
  %v1239 = vmul.f32 %v1217, %v1225
  %v1240 = vmul.f32 %v1218, %v1225
  %v1241 = vmul.f32 %v1219, %v1225
  %v1242 = vmul.f32 %v1220, %v1225
  %v1243 = vadd.f32 %v922, %v960
  %v1244 = vadd.f32 %v923, %v961
  %v1245 = vadd.f32 %v924, %v962
  %v1246 = vadd.f32 %v925, %v963
  %v1247 = vadd.f32 %v926, %v964
  %v1248 = vadd.f32 %v927, %v965
  %v1249 = vadd.f32 %v928, %v966
  %v1250 = vadd.f32 %v929, %v967
  %v1251 = vadd.f32 %v930, %v968
  %v1252 = vadd.f32 %v931, %v969
  %v1253 = vadd.f32 %v932, %v970
  %v1254 = vadd.f32 %v933, %v971
  %v1255 = vadd.f32 %v934, %v972
  %v1256 = vadd.f32 %v935, %v973
  %v1257 = vadd.f32 %v936, %v974
  %v1258 = vadd.f32 %v937, %v975
  %v1259 = vadd.f32 %v998, %v1036
  %v1260 = vadd.f32 %v999, %v1037
  %v1261 = vadd.f32 %v1000, %v1038
  %v1262 = vadd.f32 %v1001, %v1039
  %v1263 = vadd.f32 %v1002, %v1040
  %v1264 = vadd.f32 %v1003, %v1041
  %v1265 = vadd.f32 %v1004, %v1042
  %v1266 = vadd.f32 %v1005, %v1043
  %v1267 = vadd.f32 %v1006, %v1044
  %v1268 = vadd.f32 %v1007, %v1045
  %v1269 = vadd.f32 %v1008, %v1046
  %v1270 = vadd.f32 %v1009, %v1047
  %v1271 = vadd.f32 %v1010, %v1048
  %v1272 = vadd.f32 %v1011, %v1049
  %v1273 = vadd.f32 %v1012, %v1050
  %v1274 = vadd.f32 %v1013, %v1051
  %v1275 = vadd.f32 %v1074, %v1112
  %v1276 = vadd.f32 %v1075, %v1113
  %v1277 = vadd.f32 %v1076, %v1114
  %v1278 = vadd.f32 %v1077, %v1115
  %v1279 = vadd.f32 %v1078, %v1116
  %v1280 = vadd.f32 %v1079, %v1117
  %v1281 = vadd.f32 %v1080, %v1118
  %v1282 = vadd.f32 %v1081, %v1119
  %v1283 = vadd.f32 %v1082, %v1120
  %v1284 = vadd.f32 %v1083, %v1121
  %v1285 = vadd.f32 %v1084, %v1122
  %v1286 = vadd.f32 %v1085, %v1123
  %v1287 = vadd.f32 %v1086, %v1124
  %v1288 = vadd.f32 %v1087, %v1125
  %v1289 = vadd.f32 %v1088, %v1126
  %v1290 = vadd.f32 %v1089, %v1127
  %v1291 = vadd.f32 %v1151, %v1189
  %v1292 = vadd.f32 %v1152, %v1190
  %v1293 = vadd.f32 %v1153, %v1191
  %v1294 = vadd.f32 %v1154, %v1192
  %v1295 = vadd.f32 %v1155, %v1193
  %v1296 = vadd.f32 %v1156, %v1194
  %v1297 = vadd.f32 %v1157, %v1195
  %v1298 = vadd.f32 %v1158, %v1196
  %v1299 = vadd.f32 %v1159, %v1197
  %v1300 = vadd.f32 %v1160, %v1198
  %v1301 = vadd.f32 %v1161, %v1199
  %v1302 = vadd.f32 %v1162, %v1200
  %v1303 = vadd.f32 %v1163, %v1201
  %v1304 = vadd.f32 %v1164, %v1202
  %v1305 = vadd.f32 %v1165, %v1203
  %v1306 = vadd.f32 %v1166, %v1204
  %v1307 = vadd.f32 %v1243, %v1259
  %v1308 = vadd.f32 %v1244, %v1260
  %v1309 = vadd.f32 %v1245, %v1261
  %v1310 = vadd.f32 %v1246, %v1262
  %v1311 = vadd.f32 %v1247, %v1263
  %v1312 = vadd.f32 %v1248, %v1264
  %v1313 = vadd.f32 %v1249, %v1265
  %v1314 = vadd.f32 %v1250, %v1266
  %v1315 = vadd.f32 %v1251, %v1267
  %v1316 = vadd.f32 %v1252, %v1268
  %v1317 = vadd.f32 %v1253, %v1269
  %v1318 = vadd.f32 %v1254, %v1270
  %v1319 = vadd.f32 %v1255, %v1271
  %v1320 = vadd.f32 %v1256, %v1272
  %v1321 = vadd.f32 %v1257, %v1273
  %v1322 = vadd.f32 %v1258, %v1274
  %v1323 = vadd.f32 %v1275, %v1291
  %v1324 = vadd.f32 %v1276, %v1292
  %v1325 = vadd.f32 %v1277, %v1293
  %v1326 = vadd.f32 %v1278, %v1294
  %v1327 = vadd.f32 %v1279, %v1295
  %v1328 = vadd.f32 %v1280, %v1296
  %v1329 = vadd.f32 %v1281, %v1297
  %v1330 = vadd.f32 %v1282, %v1298
  %v1331 = vadd.f32 %v1283, %v1299
  %v1332 = vadd.f32 %v1284, %v1300
  %v1333 = vadd.f32 %v1285, %v1301
  %v1334 = vadd.f32 %v1286, %v1302
  %v1335 = vadd.f32 %v1287, %v1303
  %v1336 = vadd.f32 %v1288, %v1304
  %v1337 = vadd.f32 %v1289, %v1305
  %v1338 = vadd.f32 %v1290, %v1306
  %v1339 = vadd.f32 %v1307, %v1323
  %v1340 = vadd.f32 %v1308, %v1324
  %v1341 = vadd.f32 %v1309, %v1325
  %v1342 = vadd.f32 %v1310, %v1326
  %v1343 = vadd.f32 %v1311, %v1327
  %v1344 = vadd.f32 %v1312, %v1328
  %v1345 = vadd.f32 %v1313, %v1329
  %v1346 = vadd.f32 %v1314, %v1330
  %v1347 = vadd.f32 %v1315, %v1331
  %v1348 = vadd.f32 %v1316, %v1332
  %v1349 = vadd.f32 %v1317, %v1333
  %v1350 = vadd.f32 %v1318, %v1334
  %v1351 = vadd.f32 %v1319, %v1335
  %v1352 = vadd.f32 %v1320, %v1336
  %v1353 = vadd.f32 %v1321, %v1337
  %v1354 = vadd.f32 %v1322, %v1338
  %v1355 = vadd.f32 %v1339, %v1227
  %v1356 = vadd.f32 %v1340, %v1228
  %v1357 = vadd.f32 %v1341, %v1229
  %v1358 = vadd.f32 %v1342, %v1230
  %v1359 = vadd.f32 %v1343, %v1231
  %v1360 = vadd.f32 %v1344, %v1232
  %v1361 = vadd.f32 %v1345, %v1233
  %v1362 = vadd.f32 %v1346, %v1234
  %v1363 = vadd.f32 %v1347, %v1235
  %v1364 = vadd.f32 %v1348, %v1236
  %v1365 = vadd.f32 %v1349, %v1237
  %v1366 = vadd.f32 %v1350, %v1238
  %v1367 = vadd.f32 %v1351, %v1239
  %v1368 = vadd.f32 %v1352, %v1240
  %v1369 = vadd.f32 %v1353, %v1241
  %v1370 = vadd.f32 %v1354, %v1242
  %v1371 = vld [vmem:[%s8] sm:$0x1]
  %v1373 = vlaneseq
  %v1374 = vshrl.u32 %v1373, 7
  %v1375 = vsub.s32 0, %v1374
  %v1376 = vrot.slane %v1371, %v1375
  %v1378 = vmul.f32 %v1355, %v1376
  %v1379 = vmul.f32 %v1356, %v1376
  %v1380 = vmul.f32 %v1357, %v1376
  %v1381 = vmul.f32 %v1358, %v1376
  %v1382 = vmul.f32 %v1359, %v1376
  %v1383 = vmul.f32 %v1360, %v1376
  %v1384 = vmul.f32 %v1361, %v1376
  %v1385 = vmul.f32 %v1362, %v1376
  %v1386 = vmul.f32 %v1363, %v1376
  %v1387 = vmul.f32 %v1364, %v1376
  %v1388 = vmul.f32 %v1365, %v1376
  %v1389 = vmul.f32 %v1366, %v1376
  %v1390 = vmul.f32 %v1367, %v1376
  %v1391 = vmul.f32 %v1368, %v1376
  %v1392 = vmul.f32 %v1369, %v1376
  %v1393 = vmul.f32 %v1370, %v1376
  %v1394 = vld [vmem:[%s9] sm:$0x1]
  %v1396 = vlaneseq
  %v1397 = vshrl.u32 %v1396, 7
  %v1398 = vsub.s32 0, %v1397
  %v1399 = vrot.slane %v1394, %v1398
  %v1401 = vadd.f32 %v1378, %v1399
  %v1402 = vadd.f32 %v1379, %v1399
  %v1403 = vadd.f32 %v1380, %v1399
  %v1404 = vadd.f32 %v1381, %v1399
  %v1405 = vadd.f32 %v1382, %v1399
  %v1406 = vadd.f32 %v1383, %v1399
  %v1407 = vadd.f32 %v1384, %v1399
  %v1408 = vadd.f32 %v1385, %v1399
  %v1409 = vadd.f32 %v1386, %v1399
  %v1410 = vadd.f32 %v1387, %v1399
  %v1411 = vadd.f32 %v1388, %v1399
  %v1412 = vadd.f32 %v1389, %v1399
  %v1413 = vadd.f32 %v1390, %v1399
  %v1414 = vadd.f32 %v1391, %v1399
  %v1415 = vadd.f32 %v1392, %v1399
  %v1416 = vadd.f32 %v1393, %v1399
  %v1417 = vmax.f32 %v1401, 0.0
  %v1418 = vmax.f32 %v1402, 0.0
  %v1419 = vmax.f32 %v1403, 0.0
  %v1420 = vmax.f32 %v1404, 0.0
  %v1421 = vmax.f32 %v1405, 0.0
  %v1422 = vmax.f32 %v1406, 0.0
  %v1423 = vmax.f32 %v1407, 0.0
  %v1424 = vmax.f32 %v1408, 0.0
  %v1425 = vmax.f32 %v1409, 0.0
  %v1426 = vmax.f32 %v1410, 0.0
  %v1427 = vmax.f32 %v1411, 0.0
  %v1428 = vmax.f32 %v1412, 0.0
  %v1429 = vmax.f32 %v1413, 0.0
  %v1430 = vmax.f32 %v1414, 0.0
  %v1431 = vmax.f32 %v1415, 0.0
  %v1432 = vmax.f32 %v1416, 0.0
  %v1433 = vmin.f32 %v1417, 6.0
  %v1434 = vmin.f32 %v1418, 6.0
  %v1435 = vmin.f32 %v1419, 6.0
  %v1436 = vmin.f32 %v1420, 6.0
  %v1437 = vmin.f32 %v1421, 6.0
  %v1438 = vmin.f32 %v1422, 6.0
  %v1439 = vmin.f32 %v1423, 6.0
  %v1440 = vmin.f32 %v1424, 6.0
  %v1441 = vmin.f32 %v1425, 6.0
  %v1442 = vmin.f32 %v1426, 6.0
  %v1443 = vmin.f32 %v1427, 6.0
  %v1444 = vmin.f32 %v1428, 6.0
  %v1445 = vmin.f32 %v1429, 6.0
  %v1446 = vmin.f32 %v1430, 6.0
  %v1447 = vmin.f32 %v1431, 6.0
  %v1448 = vmin.f32 %v1432, 6.0
  %v1449 = vpack.c.bf16 %v1434, %v1433
  %v1450 = vpack.c.bf16 %v1436, %v1435
  %v1451 = vpack.c.bf16 %v1438, %v1437
  %v1452 = vpack.c.bf16 %v1440, %v1439
  %v1453 = vpack.c.bf16 %v1442, %v1441
  %v1454 = vpack.c.bf16 %v1444, %v1443
  %v1455 = vpack.c.bf16 %v1446, %v1445
  %v1456 = vpack.c.bf16 %v1448, %v1447
  %v1457 = vld [vmem:[%s10] sm:$0xf]
  %v1459 = vsel %vm820, %v1449, 0
  %v1462 = vsel %vm820, %v1450, 0
  %v1465 = vsel %vm820, %v1451, 0
  %v1468 = vsel %vm820, %v1452, 0
  %v1471 = vsel %vm820, %v1453, 0
  %v1474 = vsel %vm820, %v1454, 0
  %v1477 = vsel %vm820, %v1455, 0
  %v1480 = vsel %vm820, %v1456, 0
  %vm1482 = vcmask 1043456
  %v1484 = vsel %vm1482, %v1457, 0
  %1486 = vmatprep.subr.bf16.mxu0 0
  %1487 = vmatpush1.bf16.msra.mxu0 0
  %1488 = vmatprep.subr.bf16.mxu0 0
  %1489 = vmatpush1.bf16.msra.mxu0 0
  %1490 = vmatprep.subr.bf16.mxu0 0
  %1491 = vmatpush1.bf16.msra.mxu0 0
  %1492 = vmatprep.subr.bf16.mxu0 0
  %1493 = vmatpush1.bf16.msra.mxu0 0
  %1494 = vmatprep.subr.bf16.mxu0 0
  %1495 = vmatpush1.bf16.msra.mxu0 0
  %1496 = vmatprep.subr.bf16.mxu0 0
  %1497 = vmatpush1.bf16.msra.mxu0 0
  %1498 = vmatprep.subr.bf16.mxu0 0
  %1499 = vmatpush1.bf16.msra.mxu0 0
  %1500 = vmatprep.subr.bf16.mxu0 0
  %1501 = vmatpush1.bf16.msra.mxu0 %v1484
  %1502 = vmatprep.subr.bf16.mxu0 0
  %1503 = vmatpush2.bf16.msra.mxu0 0
  %1504 = vmatprep.subr.bf16.mxu0 0
  %1505 = vmatpush2.bf16.msra.mxu0 0
  %1506 = vmatprep.subr.bf16.mxu0 0
  %1507 = vmatpush2.bf16.msra.mxu0 0
  %1508 = vmatprep.subr.bf16.mxu0 0
  %1509 = vmatpush2.bf16.msra.mxu0 0
  %1510 = vmatprep.subr.bf16.mxu0 0
  %1511 = vmatpush2.bf16.msra.mxu0 0
  %1512 = vmatprep.subr.bf16.mxu0 0
  %1513 = vmatpush2.bf16.msra.mxu0 0
  %1514 = vmatprep.subr.bf16.mxu0 0
  %1515 = vmatpush2.bf16.msra.mxu0 0
  %1516 = vmatprep.subr.bf16.mxu0 0
  %1517 = vmatpush2.bf16.msra.mxu0 0
  %1518 = vmatprep.mubr.bf16.mxu0 0
  %1519 = vmatmul.mubr.bf16.gmra.mxu0 %v1459
  %v1520 = vpop.f32.mrf.mxu0
  %v1521 = vadd.f32 0.0, %v1520
  %v1522 = vpop.f32.mrf.mxu0
  %v1523 = vpop.f32.mrf.mxu0
  %v1524 = vadd.f32 0.0, %v1523
  %v1525 = vpop.f32.mrf.mxu0
  %1526 = vmatprep.mubr.bf16.mxu0 0
  %1527 = vmatmul.mubr.bf16.gmra.mxu0 %v1462
  %v1528 = vpop.f32.mrf.mxu0
  %v1529 = vadd.f32 0.0, %v1528
  %v1530 = vpop.f32.mrf.mxu0
  %v1531 = vpop.f32.mrf.mxu0
  %v1532 = vadd.f32 0.0, %v1531
  %v1533 = vpop.f32.mrf.mxu0
  %1534 = vmatprep.mubr.bf16.mxu0 0
  %1535 = vmatmul.mubr.bf16.gmra.mxu0 %v1465
  %v1536 = vpop.f32.mrf.mxu0
  %v1537 = vadd.f32 0.0, %v1536
  %v1538 = vpop.f32.mrf.mxu0
  %v1539 = vpop.f32.mrf.mxu0
  %v1540 = vadd.f32 0.0, %v1539
  %v1541 = vpop.f32.mrf.mxu0
  %1542 = vmatprep.mubr.bf16.mxu0 0
  %1543 = vmatmul.mubr.bf16.gmra.mxu0 %v1468
  %v1544 = vpop.f32.mrf.mxu0
  %v1545 = vadd.f32 0.0, %v1544
  %v1546 = vpop.f32.mrf.mxu0
  %v1547 = vpop.f32.mrf.mxu0
  %v1548 = vadd.f32 0.0, %v1547
  %v1549 = vpop.f32.mrf.mxu0
  %1550 = vmatprep.mubr.bf16.mxu0 0
  %1551 = vmatmul.mubr.bf16.gmra.mxu0 %v1471
  %v1552 = vpop.f32.mrf.mxu0
  %v1553 = vadd.f32 0.0, %v1552
  %v1554 = vpop.f32.mrf.mxu0
  %v1555 = vpop.f32.mrf.mxu0
  %v1556 = vadd.f32 0.0, %v1555
  %v1557 = vpop.f32.mrf.mxu0
  %1558 = vmatprep.mubr.bf16.mxu0 0
  %1559 = vmatmul.mubr.bf16.gmra.mxu0 %v1474
  %v1560 = vpop.f32.mrf.mxu0
  %v1561 = vadd.f32 0.0, %v1560
  %v1562 = vpop.f32.mrf.mxu0
  %v1563 = vpop.f32.mrf.mxu0
  %v1564 = vadd.f32 0.0, %v1563
  %v1565 = vpop.f32.mrf.mxu0
  %1566 = vmatprep.mubr.bf16.mxu0 0
  %1567 = vmatmul.mubr.bf16.gmra.mxu0 %v1477
  %v1568 = vpop.f32.mrf.mxu0
  %v1569 = vadd.f32 0.0, %v1568
  %v1570 = vpop.f32.mrf.mxu0
  %v1571 = vpop.f32.mrf.mxu0
  %v1572 = vadd.f32 0.0, %v1571
  %v1573 = vpop.f32.mrf.mxu0
  %1574 = vmatprep.mubr.bf16.mxu0 0
  %1575 = vmatmul.mubr.bf16.gmra.mxu0 %v1480
  %v1576 = vpop.f32.mrf.mxu0
  %v1577 = vadd.f32 0.0, %v1576
  %v1578 = vpop.f32.mrf.mxu0
  %v1579 = vpop.f32.mrf.mxu0
  %v1580 = vadd.f32 0.0, %v1579
  %v1581 = vpop.f32.mrf.mxu0
  %1582 = vdwg.mxu0
  %v1583 = vld [vmem:[%s11] sm:$0x1]
  %v1585 = vlaneseq
  %v1586 = vshrl.u32 %v1585, 7
  %v1587 = vsub.s32 0, %v1586
  %v1588 = vrot.slane %v1583, %v1587
  %v1590 = vmul.f32 %v1521, %v1588
  %v1591 = vmul.f32 %v1524, %v1588
  %v1592 = vmul.f32 %v1529, %v1588
  %v1593 = vmul.f32 %v1532, %v1588
  %v1594 = vmul.f32 %v1537, %v1588
  %v1595 = vmul.f32 %v1540, %v1588
  %v1596 = vmul.f32 %v1545, %v1588
  %v1597 = vmul.f32 %v1548, %v1588
  %v1598 = vmul.f32 %v1553, %v1588
  %v1599 = vmul.f32 %v1556, %v1588
  %v1600 = vmul.f32 %v1561, %v1588
  %v1601 = vmul.f32 %v1564, %v1588
  %v1602 = vmul.f32 %v1569, %v1588
  %v1603 = vmul.f32 %v1572, %v1588
  %v1604 = vmul.f32 %v1577, %v1588
  %v1605 = vmul.f32 %v1580, %v1588
  %v1606 = vld [vmem:[%s12] sm:$0x1]
  %v1608 = vlaneseq
  %v1609 = vshrl.u32 %v1608, 7
  %v1610 = vsub.s32 0, %v1609
  %v1611 = vrot.slane %v1606, %v1610
  %v1613 = vadd.f32 %v1590, %v1611
  %v1614 = vadd.f32 %v1591, %v1611
  %v1615 = vadd.f32 %v1592, %v1611
  %v1616 = vadd.f32 %v1593, %v1611
  %v1617 = vadd.f32 %v1594, %v1611
  %v1618 = vadd.f32 %v1595, %v1611
  %v1619 = vadd.f32 %v1596, %v1611
  %v1620 = vadd.f32 %v1597, %v1611
  %v1621 = vadd.f32 %v1598, %v1611
  %v1622 = vadd.f32 %v1599, %v1611
  %v1623 = vadd.f32 %v1600, %v1611
  %v1624 = vadd.f32 %v1601, %v1611
  %v1625 = vadd.f32 %v1602, %v1611
  %v1626 = vadd.f32 %v1603, %v1611
  %v1627 = vadd.f32 %v1604, %v1611
  %v1628 = vadd.f32 %v1605, %v1611
  %v1629 = vmax.f32 %v1613, 0.0
  %v1630 = vmax.f32 %v1614, 0.0
  %v1631 = vmax.f32 %v1615, 0.0
  %v1632 = vmax.f32 %v1616, 0.0
  %v1633 = vmax.f32 %v1617, 0.0
  %v1634 = vmax.f32 %v1618, 0.0
  %v1635 = vmax.f32 %v1619, 0.0
  %v1636 = vmax.f32 %v1620, 0.0
  %v1637 = vmax.f32 %v1621, 0.0
  %v1638 = vmax.f32 %v1622, 0.0
  %v1639 = vmax.f32 %v1623, 0.0
  %v1640 = vmax.f32 %v1624, 0.0
  %v1641 = vmax.f32 %v1625, 0.0
  %v1642 = vmax.f32 %v1626, 0.0
  %v1643 = vmax.f32 %v1627, 0.0
  %v1644 = vmax.f32 %v1628, 0.0
  %v1645 = vmin.f32 %v1629, 6.0
  %v1646 = vmin.f32 %v1630, 6.0
  %v1647 = vmin.f32 %v1631, 6.0
  %v1648 = vmin.f32 %v1632, 6.0
  %v1649 = vmin.f32 %v1633, 6.0
  %v1650 = vmin.f32 %v1634, 6.0
  %v1651 = vmin.f32 %v1635, 6.0
  %v1652 = vmin.f32 %v1636, 6.0
  %v1653 = vmin.f32 %v1637, 6.0
  %v1654 = vmin.f32 %v1638, 6.0
  %v1655 = vmin.f32 %v1639, 6.0
  %v1656 = vmin.f32 %v1640, 6.0
  %v1657 = vmin.f32 %v1641, 6.0
  %v1658 = vmin.f32 %v1642, 6.0
  %v1659 = vmin.f32 %v1643, 6.0
  %v1660 = vmin.f32 %v1644, 6.0
  %1661 = vst.msk [vmem:[%s13] sm:$0xff] %vm820, %v1645
  %1662 = vst.msk [vmem:[%s13 + $0x8] sm:$0xff] %vm820, %v1646
  %1663 = vst.msk [vmem:[%s13 + $0x10] sm:$0xff] %vm820, %v1647
  %1664 = vst.msk [vmem:[%s13 + $0x18] sm:$0xff] %vm820, %v1648
  %1665 = vst.msk [vmem:[%s13 + $0x20] sm:$0xff] %vm820, %v1649
  %1666 = vst.msk [vmem:[%s13 + $0x28] sm:$0xff] %vm820, %v1650
  %1667 = vst.msk [vmem:[%s13 + $0x30] sm:$0xff] %vm820, %v1651
  %1668 = vst.msk [vmem:[%s13 + $0x38] sm:$0xff] %vm820, %v1652
  %1669 = vst.msk [vmem:[%s13 + $0x40] sm:$0xff] %vm820, %v1653
  %1670 = vst.msk [vmem:[%s13 + $0x48] sm:$0xff] %vm820, %v1654
  %1671 = vst.msk [vmem:[%s13 + $0x50] sm:$0xff] %vm820, %v1655
  %1672 = vst.msk [vmem:[%s13 + $0x58] sm:$0xff] %vm820, %v1656
  %1673 = vst.msk [vmem:[%s13 + $0x60] sm:$0xff] %vm820, %v1657
  %1674 = vst.msk [vmem:[%s13 + $0x68] sm:$0xff] %vm820, %v1658
  %1675 = vst.msk [vmem:[%s13 + $0x70] sm:$0xff] %vm820, %v1659
  %1676 = vst.msk [vmem:[%s13 + $0x78] sm:$0xff] %vm820, %v1660
  // Predicated region
  $region54: #{depthwise_separable_forward.1} parent=0 // pred_check
    _
  $region55: #{depthwise_separable_forward.1} parent=0 // pred_check_branch
    %1678 = sbr.rel (0) target = $region57
  $region56: #{depthwise_separable_forward.1} parent=0 // pred_region
    _
  $region57: #{depthwise_separable_forward.1} parent=0 // pred_fallthru
    _
  // Predicated region
  $region58: #{depthwise_separable_forward.1} parent=0 // pred_check
    _
  $region59: #{depthwise_separable_forward.1} parent=0 // pred_check_branch
    %1680 = sbr.rel (0) target = $region61
  $region60: #{depthwise_separable_forward.1} parent=0 // pred_region
    _
  $region61: #{depthwise_separable_forward.1} parent=0 // pred_fallthru
    _

</llo_original>
